<compile_context>
chip_gen: v7x
topology: tpu7x:2x2x1
jax: 0.10.0
libtpu: 0.0.40
codegen_flags: <defaults>
</compile_context>

<pallas_src>
import functools

import jax
import jax.numpy as jnp
from jax.experimental import pallas as pl
from jax.experimental.pallas import tpu as pltpu

BN_EPS = 1e-5


def _nonlocal_kernel(x_ref,        # (1, C, HW) f32, resident across the m axis
                     wphi_ref,     # (Ci, C) bf16, BN scale folded
                     wtheta_ref,   # (Ci, C) bf16, BN scale folded
                     wg_ref,       # (Ci, C) bf16, BN scale folded
                     wmask_ref,    # (Ci, C) bf16 (= (W_mask * s).T), BN scale folded
                     bphi_ref,     # (Ci, 1) f32 shift
                     btheta_ref,   # (Ci, 1) f32 shift
                     bg_ref,       # (Ci, 1) f32 shift
                     bmask_ref,    # (1, C) f32 shift
                     o_ref,        # (1, C, HW) f32
                     theta_s,      # scratch (HW, Ci) bf16, token-major theta
                     y_acc,        # scratch (HW, Ci) f32 accumulator
                     *, tm):
    m = pl.program_id(1)
    nm = pl.num_programs(1)

    @pl.when(m == 0)
    def _init():
        # theta over all positions, stored token-major for the attention matmul.
        xb = x_ref[0].astype(jnp.bfloat16)                           # (C, HW)
        th = jnp.dot(wtheta_ref[...], xb,
                     preferred_element_type=jnp.float32)             # (Ci, HW)
        th = jnp.maximum(th + btheta_ref[...], 0.0)
        theta_s[...] = jnp.transpose(th).astype(jnp.bfloat16)        # (HW, Ci)
        y_acc[...] = jnp.zeros_like(y_acc)

    # ---- per m-tile work (phi / g positions) ------------------------------
    start = pl.multiple_of(m * tm, tm)
    x_blk = x_ref[0, :, pl.ds(start, tm)].astype(jnp.bfloat16)       # (C, tm)

    phi = jnp.maximum(
        jnp.dot(wphi_ref[...], x_blk, preferred_element_type=jnp.float32)
        + bphi_ref[...], 0.0)                                        # (Ci, tm)
    g = jnp.maximum(
        jnp.dot(wg_ref[...], x_blk, preferred_element_type=jnp.float32)
        + bg_ref[...], 0.0)                                          # (Ci, tm)

    # attn[i, j] = theta[i, :] . phi[:, j]; rows i are the softmax(dim=1) axis.
    attn = jnp.dot(theta_s[...], phi.astype(jnp.bfloat16),
                   preferred_element_type=jnp.float32)               # (HW, tm)

    # softmax over axis 0: each column is complete within this tile -> exact.
    mx = jnp.max(attn, axis=0, keepdims=True)                        # (1, tm)
    e = jnp.exp(attn - mx)                                           # (HW, tm) f32
    ssum = jnp.sum(e, axis=0, keepdims=True)                         # (1, tm)
    inv = pl.reciprocal(ssum, approx=True)                           # (1, tm)

    # Fold 1/sum into g per column, then accumulate y += e @ g_scaled^T.
    g_scaled = jnp.transpose(g * inv).astype(jnp.bfloat16)           # (tm, Ci)
    y_acc[...] += jnp.dot(e.astype(jnp.bfloat16), g_scaled,
                          preferred_element_type=jnp.float32)        # (HW, Ci)

    @pl.when(m == nm - 1)
    def _finalize():
        mask = jnp.dot(y_acc[...].astype(jnp.bfloat16), wmask_ref[...],
                       preferred_element_type=jnp.float32)           # (HW, C)
        mask = jnp.maximum(mask + bmask_ref[...], 0.0)
        # residual add in channel-major layout; HW sits on lanes -> dense store.
        o_ref[0] = jnp.transpose(mask) + x_ref[0]                    # (C, HW)


def _fuse_bn(gamma, beta, mean, var):
    """Inference BatchNorm as per-channel scale/shift (1-D vectors)."""
    scale = gamma / jnp.sqrt(var + BN_EPS)
    shift = beta - mean * scale
    return scale, shift


def nonlocal_block_pallas(x_nchw, params, *, tm=None):
    B, C, H, W = x_nchw.shape
    Ci = C // 2
    HW = H * W

    if tm is None:
        tm = HW
        for cand in (512, 256, 128):
            if HW % cand == 0:
                tm = cand
                break
    assert HW % tm == 0
    nm = HW // tm

    # Channel-major (B, C, HW): a pure reshape of NCHW -> no host transpose.
    x = x_nchw.reshape(B, C, HW).astype(jnp.float32)

    s_phi, b_phi = _fuse_bn(*params["bn_phi"])
    s_theta, b_theta = _fuse_bn(*params["bn_theta"])
    s_g, b_g = _fuse_bn(*params["bn_g"])
    s_mask, b_mask = _fuse_bn(*params["bn_mask"])

    # Fold BN scale into the 1x1 conv weights (per output channel), cast to bf16.
    w_phi = (params["w_phi"] * s_phi[:, None]).astype(jnp.bfloat16)        # (Ci, C)
    w_theta = (params["w_theta"] * s_theta[:, None]).astype(jnp.bfloat16)  # (Ci, C)
    w_g = (params["w_g"] * s_g[:, None]).astype(jnp.bfloat16)              # (Ci, C)
    # conv_mask weight is (C, Ci); kernel uses y(HW,Ci) @ w_mask_t(Ci,C).
    w_mask_t = (params["w_mask"] * s_mask[:, None]).T.astype(jnp.bfloat16)  # (Ci, C)

    b_phi_c = b_phi.reshape(Ci, 1).astype(jnp.float32)
    b_theta_c = b_theta.reshape(Ci, 1).astype(jnp.float32)
    b_g_c = b_g.reshape(Ci, 1).astype(jnp.float32)
    b_mask_r = b_mask.reshape(1, C).astype(jnp.float32)

    full2 = lambda shape: pl.BlockSpec(shape, lambda b, m: (0, 0))
    kernel = functools.partial(_nonlocal_kernel, tm=tm)

    out = pl.pallas_call(
        kernel,
        out_shape=jax.ShapeDtypeStruct((B, C, HW), jnp.float32),
        grid_spec=pltpu.PrefetchScalarGridSpec(
            num_scalar_prefetch=0,
            grid=(B, nm),
            in_specs=[
                pl.BlockSpec((1, C, HW), lambda b, m: (b, 0, 0)),  # x (resident over m)
                full2((Ci, C)),   # w_phi
                full2((Ci, C)),   # w_theta
                full2((Ci, C)),   # w_g
                full2((Ci, C)),   # w_mask (transposed)
                full2((Ci, 1)),   # phi shift
                full2((Ci, 1)),   # theta shift
                full2((Ci, 1)),   # g shift
                full2((1, C)),    # mask shift
            ],
            out_specs=pl.BlockSpec((1, C, HW), lambda b, m: (b, 0, 0)),
            scratch_shapes=[
                pltpu.VMEM((HW, Ci), jnp.bfloat16),   # theta, token-major
                pltpu.VMEM((HW, Ci), jnp.float32),    # y accumulator
            ],
        ),
        compiler_params=pltpu.CompilerParams(
            dimension_semantics=("parallel", "arbitrary"),
            vmem_limit_bytes=32 * 1024 * 1024,
        ),
    )(x, w_phi, w_theta, w_g, w_mask_t, b_phi_c, b_theta_c, b_g_c, b_mask_r)

    return out.reshape(B, C, H, W)


def nonlocal_block_ref(x_nchw, params):
    """Plain-JAX reference mirroring the PyTorch forward (eval-mode BN)."""
    B, C, H, W = x_nchw.shape
    Ci = C // 2
    HW = H * W

    def branch(x, w, bn):
        z = jnp.einsum("bchw,oc->bohw", x, w)
        gamma, beta, mean, var = bn
        z = (z - mean[None, :, None, None]) / jnp.sqrt(var[None, :, None, None] + BN_EPS)
        z = z * gamma[None, :, None, None] + beta[None, :, None, None]
        return jnp.maximum(z, 0.0)

    x = x_nchw.astype(jnp.float32)
    x_phi = branch(x, params["w_phi"], params["bn_phi"]).reshape(B, Ci, HW)
    x_theta = branch(x, params["w_theta"], params["bn_theta"]).reshape(B, Ci, HW)
    x_theta = jnp.transpose(x_theta, (0, 2, 1))
    x_g = branch(x, params["w_g"], params["bn_g"]).reshape(B, Ci, HW)
    x_g = jnp.transpose(x_g, (0, 2, 1))

    attn = jnp.einsum("bnc,bcm->bnm", x_theta, x_phi)     # (B, HW, HW)
    attn = jax.nn.softmax(attn, axis=1)                   # dim=1 (theta axis)
    y = jnp.einsum("bnm,bmc->bnc", attn, x_g)             # (B, HW, Ci)
    y = jnp.transpose(y, (0, 2, 1)).reshape(B, Ci, H, W)
    mask = branch(y, params["w_mask"], params["bn_mask"])
    return mask + x


def make_params(key, channel):
    ci = channel // 2
    ks = jax.random.split(key, 8)

    def bn_params(k, c):
        kg, kb, km, kv = jax.random.split(k, 4)
        gamma = jax.random.uniform(kg, (c,), jnp.float32, 0.5, 1.5)
        beta = jax.random.normal(kb, (c,), jnp.float32) * 0.1
        mean = jax.random.normal(km, (c,), jnp.float32) * 0.1
        var = jax.random.uniform(kv, (c,), jnp.float32, 0.5, 1.5)
        return (gamma, beta, mean, var)

    return {
        "w_phi": jax.random.normal(ks[0], (ci, channel), jnp.float32) * 0.2,
        "w_theta": jax.random.normal(ks[1], (ci, channel), jnp.float32) * 0.2,
        "w_g": jax.random.normal(ks[2], (ci, channel), jnp.float32) * 0.2,
        "w_mask": jax.random.normal(ks[3], (channel, ci), jnp.float32) * 0.2,
        "bn_phi": bn_params(ks[4], ci),
        "bn_theta": bn_params(ks[5], ci),
        "bn_g": bn_params(ks[6], ci),
        "bn_mask": bn_params(ks[7], channel),
    }


if __name__ == "__main__":
    key = jax.random.PRNGKey(0)
    kx, kp = jax.random.split(key)

    # C=16 -> inter_channel=8 keeps every 2-D operand's sublane dim >= 8
    # (TPU-friendly layouts) while staying small.  HW=256 with tm=128 gives
    # 2 m-tiles per batch item: exercises init / accumulate / finalize paths.
    B, C, H, W = 2, 16, 16, 16
    x = jax.random.normal(kx, (B, C, H, W), jnp.float32)
    params = make_params(kp, C)

    out = nonlocal_block_pallas(x, params, tm=128)
    out = jax.block_until_ready(out)

    ref = nonlocal_block_ref(x, params)
    assert out.shape == (B, C, H, W)
    max_err = float(jnp.max(jnp.abs(out - ref)))
    mean_err = float(jnp.mean(jnp.abs(out - ref)))
    # bf16 MXU operands + approx reciprocal -> loose but bug-catching tolerance.
    assert max_err < 2e-1, (max_err, mean_err)
    assert mean_err < 2e-2, (max_err, mean_err)

    print("KERNEL_OK")
</pallas_src>

<mosaic_0001>
module attributes {stable_mosaic.version = 11 : i64} {
  func.func @_nonlocal_kernel(%arg0: i32, %arg1: i32, %arg2: memref<1x16x256xf32, #tpu.memory_space<vmem>>, %arg3: memref<8x16xbf16, #tpu.memory_space<vmem>>, %arg4: memref<8x16xbf16, #tpu.memory_space<vmem>>, %arg5: memref<8x16xbf16, #tpu.memory_space<vmem>>, %arg6: memref<8x16xbf16, #tpu.memory_space<vmem>>, %arg7: memref<8x1xf32, #tpu.memory_space<vmem>>, %arg8: memref<8x1xf32, #tpu.memory_space<vmem>>, %arg9: memref<8x1xf32, #tpu.memory_space<vmem>>, %arg10: memref<1x16xf32, #tpu.memory_space<vmem>>, %arg11: memref<1x16x256xf32, #tpu.memory_space<vmem>>, %arg12: memref<256x8xbf16, #tpu.memory_space<vmem>>, %arg13: memref<256x8xf32, #tpu.memory_space<vmem>>) attributes {dimension_semantics = [#tpu.dimension_semantics<parallel>, #tpu.dimension_semantics<arbitrary>], iteration_bounds = array<i64: 2, 2>, scalar_prefetch = 0 : i64, scratch_operands = 2 : i64, tpu.core_type = #tpu.core_type<tc>, window_params = [{transform_indices = @transform_0, window_bounds = array<i64: 1, 16, 256>}, {pipeline_mode = #tpu.pipeline_mode<synchronous>, transform_indices = @transform_1, window_bounds = array<i64: 8, 16>}, {pipeline_mode = #tpu.pipeline_mode<synchronous>, transform_indices = @transform_2, window_bounds = array<i64: 8, 16>}, {pipeline_mode = #tpu.pipeline_mode<synchronous>, transform_indices = @transform_3, window_bounds = array<i64: 8, 16>}, {pipeline_mode = #tpu.pipeline_mode<synchronous>, transform_indices = @transform_4, window_bounds = array<i64: 8, 16>}, {pipeline_mode = #tpu.pipeline_mode<synchronous>, transform_indices = @transform_5, window_bounds = array<i64: 8, 1>}, {pipeline_mode = #tpu.pipeline_mode<synchronous>, transform_indices = @transform_6, window_bounds = array<i64: 8, 1>}, {pipeline_mode = #tpu.pipeline_mode<synchronous>, transform_indices = @transform_7, window_bounds = array<i64: 8, 1>}, {pipeline_mode = #tpu.pipeline_mode<synchronous>, transform_indices = @transform_8, window_bounds = array<i64: 1, 16>}, {transform_indices = @transform_9, window_bounds = array<i64: 1, 16, 256>}]} {
    %c0_i32 = arith.constant 0 : i32
    %0 = arith.cmpi eq, %arg1, %c0_i32 : i32
    %1 = arith.extui %0 : i1 to i32
    %c0_i32_0 = arith.constant 0 : i32
    %2 = arith.cmpi ne, %1, %c0_i32_0 : i32
    scf.if %2 {
      %c0_24 = arith.constant 0 : index
      %c0_25 = arith.constant 0 : index
      %c0_26 = arith.constant 0 : index
      %46 = vector.load %arg2[%c0_24, %c0_25, %c0_26] : memref<1x16x256xf32, #tpu.memory_space<vmem>>, vector<1x16x256xf32>
      %47 = vector.shape_cast %46 : vector<1x16x256xf32> to vector<16x256xf32>
      %48 = arith.truncf %47 : vector<16x256xf32> to vector<16x256xbf16>
      %c0_27 = arith.constant 0 : index
      %c0_28 = arith.constant 0 : index
      %49 = vector.load %arg4[%c0_27, %c0_28] : memref<8x16xbf16, #tpu.memory_space<vmem>>, vector<8x16xbf16>
      %cst_29 = arith.constant dense<0.000000e+00> : vector<8x256xf32>
      %50 = tpu.matmul %49, %48, %cst_29 {dimension_numbers = #tpu.dot_dimension_numbers<[1], [0], [0], [1], [0, 0, 1, 1], [], []>} : vector<8x16xbf16>, vector<16x256xbf16>, vector<8x256xf32> -> vector<8x256xf32>
      %c0_30 = arith.constant 0 : index
      %c0_31 = arith.constant 0 : index
      %51 = vector.load %arg8[%c0_30, %c0_31] : memref<8x1xf32, #tpu.memory_space<vmem>>, vector<8x1xf32>
      %52 = vector.broadcast %51 : vector<8x1xf32> to vector<8x256xf32>
      %53 = arith.addf %50, %52 : vector<8x256xf32>
      %cst_32 = arith.constant 0.000000e+00 : f32
      %54 = vector.broadcast %cst_32 : f32 to vector<8x256xf32>
      %55 = arith.maximumf %53, %54 : vector<8x256xf32>
      %56 = tpu.transpose %55, [1, 0] : vector<8x256xf32> -> vector<256x8xf32>
      %57 = arith.truncf %56 : vector<256x8xf32> to vector<256x8xbf16>
      %c0_33 = arith.constant 0 : index
      %c0_34 = arith.constant 0 : index
      %58 = vector.load %arg12[%c0_33, %c0_34] : memref<256x8xbf16, #tpu.memory_space<vmem>>, vector<256x8xbf16>
      tpu.vector_store %arg12[%c0_33, %c0_34], %57 {strides = array<i32>} : memref<256x8xbf16, #tpu.memory_space<vmem>>, vector<256x8xbf16>,
      %cst_35 = arith.constant 0.000000e+00 : f32
      %59 = vector.broadcast %cst_35 : f32 to vector<256x8xf32>
      %c0_36 = arith.constant 0 : index
      %c0_37 = arith.constant 0 : index
      %60 = vector.load %arg13[%c0_36, %c0_37] : memref<256x8xf32, #tpu.memory_space<vmem>>, vector<256x8xf32>
      tpu.vector_store %arg13[%c0_36, %c0_37], %59 {strides = array<i32>} : memref<256x8xf32, #tpu.memory_space<vmem>>, vector<256x8xf32>,
    } else {
    }
    %c128_i32 = arith.constant 128 : i32
    %3 = arith.muli %arg1, %c128_i32 : i32
    %4 = tpu.assume_multiple %3, 128 : i32
    %c0 = arith.constant 0 : index
    %c0_1 = arith.constant 0 : index
    %5 = arith.index_cast %4 : i32 to index
    %6 = vector.load %arg2[%c0, %c0_1, %5] : memref<1x16x256xf32, #tpu.memory_space<vmem>>, vector<1x16x128xf32>
    %7 = vector.shape_cast %6 : vector<1x16x128xf32> to vector<16x128xf32>
    %8 = arith.truncf %7 : vector<16x128xf32> to vector<16x128xbf16>
    %c0_2 = arith.constant 0 : index
    %c0_3 = arith.constant 0 : index
    %9 = vector.load %arg3[%c0_2, %c0_3] : memref<8x16xbf16, #tpu.memory_space<vmem>>, vector<8x16xbf16>
    %cst = arith.constant dense<0.000000e+00> : vector<8x128xf32>
    %10 = tpu.matmul %9, %8, %cst {dimension_numbers = #tpu.dot_dimension_numbers<[1], [0], [0], [1], [0, 0, 1, 1], [], []>} : vector<8x16xbf16>, vector<16x128xbf16>, vector<8x128xf32> -> vector<8x128xf32>
    %c0_4 = arith.constant 0 : index
    %c0_5 = arith.constant 0 : index
    %11 = vector.load %arg7[%c0_4, %c0_5] : memref<8x1xf32, #tpu.memory_space<vmem>>, vector<8x1xf32>
    %12 = vector.broadcast %11 : vector<8x1xf32> to vector<8x128xf32>
    %13 = arith.addf %10, %12 : vector<8x128xf32>
    %cst_6 = arith.constant 0.000000e+00 : f32
    %14 = vector.broadcast %cst_6 : f32 to vector<8x128xf32>
    %15 = arith.maximumf %13, %14 : vector<8x128xf32>
    %c0_7 = arith.constant 0 : index
    %c0_8 = arith.constant 0 : index
    %16 = vector.load %arg5[%c0_7, %c0_8] : memref<8x16xbf16, #tpu.memory_space<vmem>>, vector<8x16xbf16>
    %cst_9 = arith.constant dense<0.000000e+00> : vector<8x128xf32>
    %17 = tpu.matmul %16, %8, %cst_9 {dimension_numbers = #tpu.dot_dimension_numbers<[1], [0], [0], [1], [0, 0, 1, 1], [], []>} : vector<8x16xbf16>, vector<16x128xbf16>, vector<8x128xf32> -> vector<8x128xf32>
    %c0_10 = arith.constant 0 : index
    %c0_11 = arith.constant 0 : index
    %18 = vector.load %arg9[%c0_10, %c0_11] : memref<8x1xf32, #tpu.memory_space<vmem>>, vector<8x1xf32>
    %19 = vector.broadcast %18 : vector<8x1xf32> to vector<8x128xf32>
    %20 = arith.addf %17, %19 : vector<8x128xf32>
    %cst_12 = arith.constant 0.000000e+00 : f32
    %21 = vector.broadcast %cst_12 : f32 to vector<8x128xf32>
    %22 = arith.maximumf %20, %21 : vector<8x128xf32>
    %c0_13 = arith.constant 0 : index
    %c0_14 = arith.constant 0 : index
    %23 = vector.load %arg12[%c0_13, %c0_14] : memref<256x8xbf16, #tpu.memory_space<vmem>>, vector<256x8xbf16>
    %24 = arith.truncf %15 : vector<8x128xf32> to vector<8x128xbf16>
    %cst_15 = arith.constant dense<0.000000e+00> : vector<256x128xf32>
    %25 = tpu.matmul %23, %24, %cst_15 {dimension_numbers = #tpu.dot_dimension_numbers<[1], [0], [0], [1], [0, 0, 1, 1], [], []>} : vector<256x8xbf16>, vector<8x128xbf16>, vector<256x128xf32> -> vector<256x128xf32>
    %cst_16 = arith.constant dense<0xFF800000> : vector<128xf32>
    %26 = vector.multi_reduction <maximumf>, %25, %cst_16 [0] : vector<256x128xf32> to vector<128xf32>
    %27 = vector.shape_cast %26 : vector<128xf32> to vector<1x128xf32>
    %28 = vector.broadcast %27 : vector<1x128xf32> to vector<256x128xf32>
    %29 = arith.subf %25, %28 : vector<256x128xf32>
    %30 = math.exp %29 : vector<256x128xf32>
    %cst_17 = arith.constant dense<0.000000e+00> : vector<128xf32>
    %31 = vector.multi_reduction <add>, %30, %cst_17 [0] : vector<256x128xf32> to vector<128xf32>
    %32 = vector.shape_cast %31 : vector<128xf32> to vector<1x128xf32>
    %33 = tpu.reciprocal %32 {approx = true} : vector<1x128xf32> -> vector<1x128xf32>
    %34 = vector.broadcast %33 : vector<1x128xf32> to vector<8x128xf32>
    %35 = arith.mulf %22, %34 : vector<8x128xf32>
    %36 = tpu.transpose %35, [1, 0] : vector<8x128xf32> -> vector<128x8xf32>
    %37 = arith.truncf %36 : vector<128x8xf32> to vector<128x8xbf16>
    %c0_18 = arith.constant 0 : index
    %c0_19 = arith.constant 0 : index
    %38 = vector.load %arg13[%c0_18, %c0_19] : memref<256x8xf32, #tpu.memory_space<vmem>>, vector<256x8xf32>
    %39 = arith.truncf %30 : vector<256x128xf32> to vector<256x128xbf16>
    %cst_20 = arith.constant dense<0.000000e+00> : vector<256x8xf32>
    %40 = tpu.matmul %39, %37, %cst_20 {dimension_numbers = #tpu.dot_dimension_numbers<[1], [0], [0], [1], [0, 0, 1, 1], [], []>} : vector<256x128xbf16>, vector<128x8xbf16>, vector<256x8xf32> -> vector<256x8xf32>
    %41 = arith.addf %38, %40 : vector<256x8xf32>
    %c0_21 = arith.constant 0 : index
    %c0_22 = arith.constant 0 : index
    %42 = vector.load %arg13[%c0_21, %c0_22] : memref<256x8xf32, #tpu.memory_space<vmem>>, vector<256x8xf32>
    tpu.vector_store %arg13[%c0_21, %c0_22], %41 {strides = array<i32>} : memref<256x8xf32, #tpu.memory_space<vmem>>, vector<256x8xf32>,
    %c1_i32 = arith.constant 1 : i32
    %43 = arith.cmpi eq, %arg1, %c1_i32 : i32
    %44 = arith.extui %43 : i1 to i32
    %c0_i32_23 = arith.constant 0 : i32
    %45 = arith.cmpi ne, %44, %c0_i32_23 : i32
    scf.if %45 {
      %c0_24 = arith.constant 0 : index
      %c0_25 = arith.constant 0 : index
      %46 = vector.load %arg13[%c0_24, %c0_25] : memref<256x8xf32, #tpu.memory_space<vmem>>, vector<256x8xf32>
      %47 = arith.truncf %46 : vector<256x8xf32> to vector<256x8xbf16>
      %c0_26 = arith.constant 0 : index
      %c0_27 = arith.constant 0 : index
      %48 = vector.load %arg6[%c0_26, %c0_27] : memref<8x16xbf16, #tpu.memory_space<vmem>>, vector<8x16xbf16>
      %cst_28 = arith.constant dense<0.000000e+00> : vector<256x16xf32>
      %49 = tpu.matmul %47, %48, %cst_28 {dimension_numbers = #tpu.dot_dimension_numbers<[1], [0], [0], [1], [0, 0, 1, 1], [], []>} : vector<256x8xbf16>, vector<8x16xbf16>, vector<256x16xf32> -> vector<256x16xf32>
      %c0_29 = arith.constant 0 : index
      %c0_30 = arith.constant 0 : index
      %50 = vector.load %arg10[%c0_29, %c0_30] : memref<1x16xf32, #tpu.memory_space<vmem>>, vector<1x16xf32>
      %51 = vector.broadcast %50 : vector<1x16xf32> to vector<256x16xf32>
      %52 = arith.addf %49, %51 : vector<256x16xf32>
      %cst_31 = arith.constant 0.000000e+00 : f32
      %53 = vector.broadcast %cst_31 : f32 to vector<256x16xf32>
      %54 = arith.maximumf %52, %53 : vector<256x16xf32>
      %55 = tpu.transpose %54, [1, 0] : vector<256x16xf32> -> vector<16x256xf32>
      %c0_32 = arith.constant 0 : index
      %c0_33 = arith.constant 0 : index
      %c0_34 = arith.constant 0 : index
      %56 = vector.load %arg2[%c0_32, %c0_33, %c0_34] : memref<1x16x256xf32, #tpu.memory_space<vmem>>, vector<1x16x256xf32>
      %57 = vector.shape_cast %56 : vector<1x16x256xf32> to vector<16x256xf32>
      %58 = arith.addf %55, %57 : vector<16x256xf32>
      %c0_35 = arith.constant 0 : index
      %c0_36 = arith.constant 0 : index
      %c0_37 = arith.constant 0 : index
      %59 = vector.load %arg11[%c0_35, %c0_36, %c0_37] : memref<1x16x256xf32, #tpu.memory_space<vmem>>, vector<1x16x256xf32>
      %60 = vector.shape_cast %59 : vector<1x16x256xf32> to vector<16x256xf32>
      %61 = vector.shape_cast %58 : vector<16x256xf32> to vector<1x16x256xf32>
      tpu.vector_store %arg11[%c0_35, %c0_36, %c0_37], %61 {strides = array<i32>} : memref<1x16x256xf32, #tpu.memory_space<vmem>>, vector<1x16x256xf32>,
    } else {
    }
    return
  }
  func.func @transform_0(%arg0: i32, %arg1: i32) -> (i32, i32, i32) {
    %c0_i32 = arith.constant 0 : i32
    %c0_i32_0 = arith.constant 0 : i32
    %c0_i32_1 = arith.constant 0 : i32
    return %arg0, %c0_i32, %c0_i32_0 : i32, i32, i32
  }
  func.func @transform_1(%arg0: i32, %arg1: i32) -> (i32, i32) {
    %c0_i32 = arith.constant 0 : i32
    %c0_i32_0 = arith.constant 0 : i32
    %c0_i32_1 = arith.constant 0 : i32
    return %c0_i32, %c0_i32_0 : i32, i32
  }
  func.func @transform_2(%arg0: i32, %arg1: i32) -> (i32, i32) {
    %c0_i32 = arith.constant 0 : i32
    %c0_i32_0 = arith.constant 0 : i32
    %c0_i32_1 = arith.constant 0 : i32
    return %c0_i32, %c0_i32_0 : i32, i32
  }
  func.func @transform_3(%arg0: i32, %arg1: i32) -> (i32, i32) {
    %c0_i32 = arith.constant 0 : i32
    %c0_i32_0 = arith.constant 0 : i32
    %c0_i32_1 = arith.constant 0 : i32
    return %c0_i32, %c0_i32_0 : i32, i32
  }
  func.func @transform_4(%arg0: i32, %arg1: i32) -> (i32, i32) {
    %c0_i32 = arith.constant 0 : i32
    %c0_i32_0 = arith.constant 0 : i32
    %c0_i32_1 = arith.constant 0 : i32
    return %c0_i32, %c0_i32_0 : i32, i32
  }
  func.func @transform_5(%arg0: i32, %arg1: i32) -> (i32, i32) {
    %c0_i32 = arith.constant 0 : i32
    %c0_i32_0 = arith.constant 0 : i32
    %c0_i32_1 = arith.constant 0 : i32
    return %c0_i32, %c0_i32_0 : i32, i32
  }
  func.func @transform_6(%arg0: i32, %arg1: i32) -> (i32, i32) {
    %c0_i32 = arith.constant 0 : i32
    %c0_i32_0 = arith.constant 0 : i32
    %c0_i32_1 = arith.constant 0 : i32
    return %c0_i32, %c0_i32_0 : i32, i32
  }
  func.func @transform_7(%arg0: i32, %arg1: i32) -> (i32, i32) {
    %c0_i32 = arith.constant 0 : i32
    %c0_i32_0 = arith.constant 0 : i32
    %c0_i32_1 = arith.constant 0 : i32
    return %c0_i32, %c0_i32_0 : i32, i32
  }
  func.func @transform_8(%arg0: i32, %arg1: i32) -> (i32, i32) {
    %c0_i32 = arith.constant 0 : i32
    %c0_i32_0 = arith.constant 0 : i32
    %c0_i32_1 = arith.constant 0 : i32
    return %c0_i32, %c0_i32_0 : i32, i32
  }
  func.func @transform_9(%arg0: i32, %arg1: i32) -> (i32, i32, i32) {
    %c0_i32 = arith.constant 0 : i32
    %c0_i32_0 = arith.constant 0 : i32
    %c0_i32_1 = arith.constant 0 : i32
    return %arg0, %c0_i32, %c0_i32_0 : i32, i32, i32
  }
}

</mosaic_0001>

<llo_original>
// kernel: tpu_custom_call.1
$region0: #{tpu_custom_call.1}
  #allocation0 [shape = 'u32[]', space=smem, size = 0x4, offset = 0x4, fixed_abs, tag = 'smem constant byte address 0x4 - core index']
  #allocation1 [shape = 'u32[144,128]{1,0:T(1,128)}', space=vmem, size = 0x12000, scoped, tag = 'internal scratch']
  #allocation2 [shape = 'bf16[256,8]{1,0:T(16,128)(2,1)}', space=vmem, size = 0x10000, scoped, tag = 'scratch operand']
  #allocation3 [shape = 'f32[256,8]{1,0:T(8,128)}', space=vmem, size = 0x20000, scoped, tag = 'scratch operand']
  %s0 = inlined_call_operand.hbm [shape: f32[2,16,256], index: 0, kind: input, shape index: {}]
  %s1 = inlined_call_operand.vmem [shape: bf16[8,16], index: 1, kind: input, shape index: {}]
  %s2 = inlined_call_operand.vmem [shape: bf16[8,16], index: 2, kind: input, shape index: {}]
  %s3 = inlined_call_operand.vmem [shape: bf16[8,16], index: 3, kind: input, shape index: {}]
  %s4 = inlined_call_operand.vmem [shape: bf16[8,16], index: 4, kind: input, shape index: {}]
  %s5 = inlined_call_operand.vmem [shape: f32[8,1], index: 5, kind: input, shape index: {}]
  %s6 = inlined_call_operand.vmem [shape: f32[8,1], index: 6, kind: input, shape index: {}]
  %s7 = inlined_call_operand.vmem [shape: f32[8,1], index: 7, kind: input, shape index: {}]
  %s8 = inlined_call_operand.vmem [shape: f32[1,16], index: 8, kind: input, shape index: {}]
  %s9 = inlined_call_operand.hbm [shape: f32[2,16,256], index: 9, kind: output, shape index: {}]
  %s10 = sld [smem:[#allocation0]]
  $region81: #{tpu_custom_call.1} parent=0
    _
  %s12 = ssub.s32 1, %s10
  %s13 = scalar_select 0, %s12, %s10
  $region1: #{tpu_custom_call.1} parent=0
    #allocation4 [shape = 'u8[32768]{0}', space=vmem, size = 0x8000, scoped, tag = 'input window, operand 0']
    #allocation5 [shape = 's32[2]{0}', space=sflag, size = 0x8, scoped, tag = 'scoped memory for tpu_custom_call.1']
    #allocation6 [shape = 's32[2]{0}', space=sflag, size = 0x8, scoped, tag = 'scoped memory for tpu_custom_call.1']
    #allocation7 [shape = 'u8[32768]{0}', space=vmem, size = 0x8000, scoped, tag = 'output window, operand 0']
    %14 = vsyncpa [#allocation5], 0
    %s15 = scalar_lea.sflag [#allocation5], 1
    %16 = vsyncpa %s15, 0
    %17 = vsyncpa [#allocation6], 0
    %s18 = scalar_lea.sflag [#allocation6], 1
    %19 = vsyncpa %s18, 0
    loop: start=0, step=1, limit=6
    $region2: #{tpu_custom_call.1} parent=1 // loop_pre_header
      _
    $region3: #{tpu_custom_call.1} parent=1 // loop_header
      %s21 = sphi 0, %s25
      %p22 = scmp.ge.s32.totalorder %s21, 6
      %s28 = sphi 0, %s40
      %s29 = sphi 0, %s36
      %s30 = sphi 0, %s28
      %s31 = sphi 0, %s29
      %s32 = sphi 0, %s30
      %s33 = sphi 0, %s31
      %s43 = sphi 0, %s45
      %s46 = sphi 0, %s43
      %s47 = sphi 0, %s46
      %s63 = sphi 0, %s47
      %s67 = sphi 0, %s67
      %s69 = sphi 0, %s67
      %s70 = sphi 0, %s69
      %s84 = sphi 0, %s70
      %s88 = sphi 0, %s88
      %s90 = sphi 0, %s88
      %s91 = sphi 0, %s90
      %s105 = sphi 0, %s91
      %s109 = sphi 0, %s109
      %s111 = sphi 0, %s109
      %s112 = sphi 0, %s111
      %s126 = sphi 0, %s112
      %s130 = sphi 0, %s130
      %s132 = sphi 0, %s130
      %s133 = sphi 0, %s132
      %s147 = sphi 0, %s133
      %s151 = sphi 0, %s151
      %s153 = sphi 0, %s151
      %s154 = sphi 0, %s153
      %s168 = sphi 0, %s154
      %s172 = sphi 0, %s172
      %s174 = sphi 0, %s172
      %s175 = sphi 0, %s174
      %s189 = sphi 0, %s175
      %s193 = sphi 0, %s193
      %s195 = sphi 0, %s193
      %s196 = sphi 0, %s195
      %s210 = sphi 0, %s196
      %s214 = sphi 0, %s214
      %s216 = sphi 0, %s214
      %s217 = sphi 0, %s216
      %s231 = sphi 0, %s217
      %s237 = sphi 0, %s239
      %s240 = sphi 0, %s237
      %s241 = sphi 0, %s240
      %s257 = sphi 0, %s241
    $region4: #{tpu_custom_call.1} parent=1 // loop_header_branch
      %24 = sbr.rel (%p22) target = $region8
    $region5: #{tpu_custom_call.1} parent=1 // loop_body
      %s26 = ssub.s32 %s21, 1
      %s27 = ssub.s32 %s21, 2
      %s34 = sadd.s32 1, %s29
      %p35 = scmp.ge.s32.totalorder %s34, 2
      %s36 = scalar_select %p35, 0, %s34
      %s37 = sadd.s32 1, %s28
      %s38 = scalar_select %p35, %s37, %s28
      %p39 = scmp.ge.s32.totalorder %s38, 2
      %s40 = scalar_select %p39, 0, %s38
      %s41 = ssub.s32 %s28, %s40
      %p42 = scmp.eq.s32.totalorder %s41, 0
      %s44 = sadd.s32 %s43, 1
      %s45 = scalar_select %p42, %s43, %s44
      %p48 = pneg %p42
      %p49 = scmp.eq.s32.totalorder %s21, 3
      %p50 = por %p48, %p49
      %p51 = scmp.ne.s32.totalorder %s43, %s46
      %p52 = scmp.eq.s32.totalorder %s21, 0
      %p53 = por %p51, %p52
      %p54 = scmp.ne.s32.totalorder %s43, %s46
      %p55 = scmp.eq.s32.totalorder %s26, 3
      %p56 = por %p54, %p55
      %p57 = scmp.ne.s32.totalorder %s46, %s47
      %p58 = scmp.eq.s32.totalorder %s26, 0
      %p59 = por %p57, %p58
      %p60 = scmp.ne.s32.totalorder %s46, %s47
      %p61 = scmp.eq.s32.totalorder %s27, 3
      %p62 = por %p60, %p61
      %p64 = scmp.ne.s32.totalorder %s47, %s63
      %p65 = scmp.eq.s32.totalorder %s27, 0
      %p66 = por %p64, %p65
      %s68 = sadd.s32 %s67, 1
      %p71 = scmp.eq.s32.totalorder %s21, 3
      %p72 = scmp.ne.s32.totalorder %s67, %s69
      %p73 = scmp.eq.s32.totalorder %s21, 0
      %p74 = por %p72, %p73
      %p75 = scmp.ne.s32.totalorder %s67, %s69
      %p76 = scmp.eq.s32.totalorder %s26, 3
      %p77 = por %p75, %p76
      %p78 = scmp.ne.s32.totalorder %s69, %s70
      %p79 = scmp.eq.s32.totalorder %s26, 0
      %p80 = por %p78, %p79
      %p81 = scmp.ne.s32.totalorder %s69, %s70
      %p82 = scmp.eq.s32.totalorder %s27, 3
      %p83 = por %p81, %p82
      %p85 = scmp.ne.s32.totalorder %s70, %s84
      %p86 = scmp.eq.s32.totalorder %s27, 0
      %p87 = por %p85, %p86
      %s89 = sadd.s32 %s88, 1
      %p92 = scmp.eq.s32.totalorder %s21, 3
      %p93 = scmp.ne.s32.totalorder %s88, %s90
      %p94 = scmp.eq.s32.totalorder %s21, 0
      %p95 = por %p93, %p94
      %p96 = scmp.ne.s32.totalorder %s88, %s90
      %p97 = scmp.eq.s32.totalorder %s26, 3
      %p98 = por %p96, %p97
      %p99 = scmp.ne.s32.totalorder %s90, %s91
      %p100 = scmp.eq.s32.totalorder %s26, 0
      %p101 = por %p99, %p100
      %p102 = scmp.ne.s32.totalorder %s90, %s91
      %p103 = scmp.eq.s32.totalorder %s27, 3
      %p104 = por %p102, %p103
      %p106 = scmp.ne.s32.totalorder %s91, %s105
      %p107 = scmp.eq.s32.totalorder %s27, 0
      %p108 = por %p106, %p107
      %s110 = sadd.s32 %s109, 1
      %p113 = scmp.eq.s32.totalorder %s21, 3
      %p114 = scmp.ne.s32.totalorder %s109, %s111
      %p115 = scmp.eq.s32.totalorder %s21, 0
      %p116 = por %p114, %p115
      %p117 = scmp.ne.s32.totalorder %s109, %s111
      %p118 = scmp.eq.s32.totalorder %s26, 3
      %p119 = por %p117, %p118
      %p120 = scmp.ne.s32.totalorder %s111, %s112
      %p121 = scmp.eq.s32.totalorder %s26, 0
      %p122 = por %p120, %p121
      %p123 = scmp.ne.s32.totalorder %s111, %s112
      %p124 = scmp.eq.s32.totalorder %s27, 3
      %p125 = por %p123, %p124
      %p127 = scmp.ne.s32.totalorder %s112, %s126
      %p128 = scmp.eq.s32.totalorder %s27, 0
      %p129 = por %p127, %p128
      %s131 = sadd.s32 %s130, 1
      %p134 = scmp.eq.s32.totalorder %s21, 3
      %p135 = scmp.ne.s32.totalorder %s130, %s132
      %p136 = scmp.eq.s32.totalorder %s21, 0
      %p137 = por %p135, %p136
      %p138 = scmp.ne.s32.totalorder %s130, %s132
      %p139 = scmp.eq.s32.totalorder %s26, 3
      %p140 = por %p138, %p139
      %p141 = scmp.ne.s32.totalorder %s132, %s133
      %p142 = scmp.eq.s32.totalorder %s26, 0
      %p143 = por %p141, %p142
      %p144 = scmp.ne.s32.totalorder %s132, %s133
      %p145 = scmp.eq.s32.totalorder %s27, 3
      %p146 = por %p144, %p145
      %p148 = scmp.ne.s32.totalorder %s133, %s147
      %p149 = scmp.eq.s32.totalorder %s27, 0
      %p150 = por %p148, %p149
      %s152 = sadd.s32 %s151, 1
      %p155 = scmp.eq.s32.totalorder %s21, 3
      %p156 = scmp.ne.s32.totalorder %s151, %s153
      %p157 = scmp.eq.s32.totalorder %s21, 0
      %p158 = por %p156, %p157
      %p159 = scmp.ne.s32.totalorder %s151, %s153
      %p160 = scmp.eq.s32.totalorder %s26, 3
      %p161 = por %p159, %p160
      %p162 = scmp.ne.s32.totalorder %s153, %s154
      %p163 = scmp.eq.s32.totalorder %s26, 0
      %p164 = por %p162, %p163
      %p165 = scmp.ne.s32.totalorder %s153, %s154
      %p166 = scmp.eq.s32.totalorder %s27, 3
      %p167 = por %p165, %p166
      %p169 = scmp.ne.s32.totalorder %s154, %s168
      %p170 = scmp.eq.s32.totalorder %s27, 0
      %p171 = por %p169, %p170
      %s173 = sadd.s32 %s172, 1
      %p176 = scmp.eq.s32.totalorder %s21, 3
      %p177 = scmp.ne.s32.totalorder %s172, %s174
      %p178 = scmp.eq.s32.totalorder %s21, 0
      %p179 = por %p177, %p178
      %p180 = scmp.ne.s32.totalorder %s172, %s174
      %p181 = scmp.eq.s32.totalorder %s26, 3
      %p182 = por %p180, %p181
      %p183 = scmp.ne.s32.totalorder %s174, %s175
      %p184 = scmp.eq.s32.totalorder %s26, 0
      %p185 = por %p183, %p184
      %p186 = scmp.ne.s32.totalorder %s174, %s175
      %p187 = scmp.eq.s32.totalorder %s27, 3
      %p188 = por %p186, %p187
      %p190 = scmp.ne.s32.totalorder %s175, %s189
      %p191 = scmp.eq.s32.totalorder %s27, 0
      %p192 = por %p190, %p191
      %s194 = sadd.s32 %s193, 1
      %p197 = scmp.eq.s32.totalorder %s21, 3
      %p198 = scmp.ne.s32.totalorder %s193, %s195
      %p199 = scmp.eq.s32.totalorder %s21, 0
      %p200 = por %p198, %p199
      %p201 = scmp.ne.s32.totalorder %s193, %s195
      %p202 = scmp.eq.s32.totalorder %s26, 3
      %p203 = por %p201, %p202
      %p204 = scmp.ne.s32.totalorder %s195, %s196
      %p205 = scmp.eq.s32.totalorder %s26, 0
      %p206 = por %p204, %p205
      %p207 = scmp.ne.s32.totalorder %s195, %s196
      %p208 = scmp.eq.s32.totalorder %s27, 3
      %p209 = por %p207, %p208
      %p211 = scmp.ne.s32.totalorder %s196, %s210
      %p212 = scmp.eq.s32.totalorder %s27, 0
      %p213 = por %p211, %p212
      %s215 = sadd.s32 %s214, 1
      %p218 = scmp.eq.s32.totalorder %s21, 3
      %p219 = scmp.ne.s32.totalorder %s214, %s216
      %p220 = scmp.eq.s32.totalorder %s21, 0
      %p221 = por %p219, %p220
      %p222 = scmp.ne.s32.totalorder %s214, %s216
      %p223 = scmp.eq.s32.totalorder %s26, 3
      %p224 = por %p222, %p223
      %p225 = scmp.ne.s32.totalorder %s216, %s217
      %p226 = scmp.eq.s32.totalorder %s26, 0
      %p227 = por %p225, %p226
      %p228 = scmp.ne.s32.totalorder %s216, %s217
      %p229 = scmp.eq.s32.totalorder %s27, 3
      %p230 = por %p228, %p229
      %p232 = scmp.ne.s32.totalorder %s217, %s231
      %p233 = scmp.eq.s32.totalorder %s27, 0
      %p234 = por %p232, %p233
      %s235 = ssub.s32 %s28, %s40
      %p236 = scmp.eq.s32.totalorder %s235, 0
      %s238 = sadd.s32 %s237, 1
      %s239 = scalar_select %p236, %s237, %s238
      %p242 = pneg %p236
      %p243 = scmp.eq.s32.totalorder %s21, 3
      %p244 = por %p242, %p243
      %p245 = scmp.ne.s32.totalorder %s237, %s240
      %p246 = scmp.eq.s32.totalorder %s21, 0
      %p247 = por %p245, %p246
      %p248 = scmp.ne.s32.totalorder %s237, %s240
      %p249 = scmp.eq.s32.totalorder %s26, 3
      %p250 = por %p248, %p249
      %p251 = scmp.ne.s32.totalorder %s240, %s241
      %p252 = scmp.eq.s32.totalorder %s26, 0
      %p253 = por %p251, %p252
      %p254 = scmp.ne.s32.totalorder %s240, %s241
      %p255 = scmp.eq.s32.totalorder %s27, 3
      %p256 = por %p254, %p255
      %p258 = scmp.ne.s32.totalorder %s241, %s257
      %p259 = scmp.eq.s32.totalorder %s27, 0
      %p260 = por %p258, %p259
      %p261 = scmp.le.s32.totalorder 1, %s21
      %p262 = scmp.lt.s32.totalorder %s21, 5
      %p263 = pnand %p261, %p262
      %p264 = pneg %p263
      // Predicated region
      $region9: #{tpu_custom_call.1} parent=5 // pred_check
        _
      $region10: #{tpu_custom_call.1} parent=5 // pred_check_branch
        %266 = sbr.rel (%p263) target = $region12
      $region11: #{tpu_custom_call.1} parent=5 // pred_region
        %s267 = ssub.s32 %s21, 1
        // Predicated region
        $region13: #{tpu_custom_call.1} parent=11 // pred_check
          %p268 = pneg %p80
        $region14: #{tpu_custom_call.1} parent=11 // pred_check_branch
          %270 = sbr.rel (%p268) target = $region16
        $region15: #{tpu_custom_call.1} parent=11 // pred_region
          _
        $region16: #{tpu_custom_call.1} parent=11 // pred_fallthru
          _
        // Predicated region
        $region17: #{tpu_custom_call.1} parent=11 // pred_check
          %p271 = pneg %p101
        $region18: #{tpu_custom_call.1} parent=11 // pred_check_branch
          %273 = sbr.rel (%p271) target = $region20
        $region19: #{tpu_custom_call.1} parent=11 // pred_region
          _
        $region20: #{tpu_custom_call.1} parent=11 // pred_fallthru
          _
        // Predicated region
        $region21: #{tpu_custom_call.1} parent=11 // pred_check
          %p274 = pneg %p122
        $region22: #{tpu_custom_call.1} parent=11 // pred_check_branch
          %276 = sbr.rel (%p274) target = $region24
        $region23: #{tpu_custom_call.1} parent=11 // pred_region
          _
        $region24: #{tpu_custom_call.1} parent=11 // pred_fallthru
          _
        // Predicated region
        $region25: #{tpu_custom_call.1} parent=11 // pred_check
          %p277 = pneg %p143
        $region26: #{tpu_custom_call.1} parent=11 // pred_check_branch
          %279 = sbr.rel (%p277) target = $region28
        $region27: #{tpu_custom_call.1} parent=11 // pred_region
          _
        $region28: #{tpu_custom_call.1} parent=11 // pred_fallthru
          _
        // Predicated region
        $region29: #{tpu_custom_call.1} parent=11 // pred_check
          %p280 = pneg %p164
        $region30: #{tpu_custom_call.1} parent=11 // pred_check_branch
          %282 = sbr.rel (%p280) target = $region32
        $region31: #{tpu_custom_call.1} parent=11 // pred_region
          _
        $region32: #{tpu_custom_call.1} parent=11 // pred_fallthru
          _
        // Predicated region
        $region33: #{tpu_custom_call.1} parent=11 // pred_check
          %p283 = pneg %p185
        $region34: #{tpu_custom_call.1} parent=11 // pred_check_branch
          %285 = sbr.rel (%p283) target = $region36
        $region35: #{tpu_custom_call.1} parent=11 // pred_region
          _
        $region36: #{tpu_custom_call.1} parent=11 // pred_fallthru
          _
        // Predicated region
        $region37: #{tpu_custom_call.1} parent=11 // pred_check
          %p286 = pneg %p206
        $region38: #{tpu_custom_call.1} parent=11 // pred_check_branch
          %288 = sbr.rel (%p286) target = $region40
        $region39: #{tpu_custom_call.1} parent=11 // pred_region
          _
        $region40: #{tpu_custom_call.1} parent=11 // pred_fallthru
          _
        // Predicated region
        $region41: #{tpu_custom_call.1} parent=11 // pred_check
          %p289 = pneg %p227
        $region42: #{tpu_custom_call.1} parent=11 // pred_check_branch
          %291 = sbr.rel (%p289) target = $region44
        $region43: #{tpu_custom_call.1} parent=11 // pred_region
          _
        $region44: #{tpu_custom_call.1} parent=11 // pred_fallthru
          _
      $region12: #{tpu_custom_call.1} parent=5 // pred_fallthru
        _
      %p292 = scmp.lt.s32.totalorder %s21, 4
      // Predicated region
      $region45: #{tpu_custom_call.1} parent=5 // pred_check
        %p293 = pneg %p292
      $region46: #{tpu_custom_call.1} parent=5 // pred_check_branch
        %295 = sbr.rel (%p293) target = $region48
      $region47: #{tpu_custom_call.1} parent=5 // pred_region
        // Predicated region
        $region49: #{tpu_custom_call.1} parent=47 // pred_check
          %p296 = pneg %p53
        $region50: #{tpu_custom_call.1} parent=47 // pred_check_branch
          %298 = sbr.rel (%p296) target = $region52
        $region51: #{tpu_custom_call.1} parent=47 // pred_region
          %s299 = sand.u32 %s43, 1
          %s300 = scalar_lea.sflag [#allocation5], %s299
          %s301 = sand.u32 %s43, 1
          %s302 = smul.addr %s301, 32
          %s303 = scalar_lea.vmem [#allocation4], %s302
          %s305 = ssub.s32 512, 512
          %306 = vsyncadd %s300, %s305
          %s307 = smul.addr %s28, 4
          %s308 = smul.addr %s307, 128
          %s309 = scalar_lea.hbm %s0, %s308
          %s310 = sshll.u32 %s303, 4
          %s311 = int_to_ptr.vmem [resolvable:$true] %s310
          %316 = dma.hbm_to_vmem [thread:$0]  %s309, 512, %s311, %s300, 256, 256, 16
        $region52: #{tpu_custom_call.1} parent=47 // pred_fallthru
          _
      $region48: #{tpu_custom_call.1} parent=5 // pred_fallthru
        _
      %p317 = scmp.le.s32.totalorder 1, %s21
      %p318 = scmp.lt.s32.totalorder %s21, 5
      %p319 = pnand %p317, %p318
      %p320 = pneg %p319
      // Predicated region
      $region53: #{tpu_custom_call.1} parent=5 // pred_check
        _
      $region54: #{tpu_custom_call.1} parent=5 // pred_check_branch
        %322 = sbr.rel (%p319) target = $region56
      $region55: #{tpu_custom_call.1} parent=5 // pred_region
        %s323 = ssub.s32 %s21, 1
        %s324 = sand.u32 %s46, 1
        %s325 = scalar_lea.sflag [#allocation5], %s324
        %s326 = sand.u32 %s46, 1
        %s327 = smul.addr %s326, 32
        %s328 = scalar_lea.vmem [#allocation4], %s327
        // Predicated region
        $region57: #{tpu_custom_call.1} parent=55 // pred_check
          %p329 = pneg %p59
        $region58: #{tpu_custom_call.1} parent=55 // pred_check_branch
          %331 = sbr.rel (%p329) target = $region60
        $region59: #{tpu_custom_call.1} parent=55 // pred_region
          %332 = dma.done %s325, 512
        $region60: #{tpu_custom_call.1} parent=55 // pred_fallthru
          _
        %s333 = sand.u32 %s46, 1
        %s334 = scalar_lea.sflag [#allocation5], %s333
        %s335 = sand.u32 %s46, 1
        %s336 = smul.addr %s335, 32
        %s337 = scalar_lea.vmem [#allocation4], %s336
        %p338 = pneg %p59
        %p339 = pneg %p56
        %p340 = pneg %p80
        %p341 = pneg %p77
        %p342 = pneg %p101
        %p343 = pneg %p98
        %p344 = pneg %p122
        %p345 = pneg %p119
        %p346 = pneg %p143
        %p347 = pneg %p140
        %p348 = pneg %p164
        %p349 = pneg %p161
        %p350 = pneg %p185
        %p351 = pneg %p182
        %p352 = pneg %p206
        %p353 = pneg %p203
        %p354 = pneg %p227
        %p355 = pneg %p224
        %p356 = pneg %p253
        %p357 = pneg %p250
        %s358 = sand.u32 %s240, 1
        %s359 = scalar_lea.sflag [#allocation6], %s358
        %s360 = sand.u32 %s240, 1
        %s361 = smul.addr %s360, 32
        %s362 = scalar_lea.vmem [#allocation7], %s361
        %p364 = scmp.eq.s32.totalorder %s31, 0
        // Predicated region
        $region61: #{tpu_custom_call.1} parent=55 // pred_check
          %p365 = pneg %p364
        $region62: #{tpu_custom_call.1} parent=55 // pred_check_branch
          %367 = sbr.rel (%p365) target = $region64
        $region63: #{tpu_custom_call.1} parent=55 // pred_region
          %v368 = vld [vmem:[%s328] sm:$0xff]
          %v369 = vld [vmem:[%s328 + $0x8] sm:$0xff]
          %v370 = vld [vmem:[%s328 + $0x10] sm:$0xff]
          %v371 = vld [vmem:[%s328 + $0x18] sm:$0xff]
          %v372 = vpack.c.bf16 %v370, %v368
          %v373 = vpack.c.bf16 %v371, %v369
          %v374 = vld [vmem:[%s2] sm:$0xf]
          %v375 = vld [vmem:[%s6] sm:$0xff]
          %377 = vset.pattern.permute.xlu0 0
          %378 = vperm.xlu0 %377, %v375
          %v379 = vpop.permute.xlu0 %378
          %vm381 = vcmask 130048
          %v383 = vsel %vm381, %v374, 0
          %385 = vmatprep.subr.bf16.mxu0 %v373
          %386 = vmatpush1.bf16.msra.mxu0 %v372
          %387 = vmatprep.subr.bf16.mxu0 0
          %388 = vmatpush1.bf16.msra.mxu0 0
          %389 = vmatprep.subr.bf16.mxu0 0
          %390 = vmatpush1.bf16.msra.mxu0 0
          %391 = vmatprep.subr.bf16.mxu0 0
          %392 = vmatpush1.bf16.msra.mxu0 0
          %393 = vmatprep.subr.bf16.mxu0 0
          %394 = vmatpush1.bf16.msra.mxu0 0
          %395 = vmatprep.subr.bf16.mxu0 0
          %396 = vmatpush1.bf16.msra.mxu0 0
          %397 = vmatprep.subr.bf16.mxu0 0
          %398 = vmatpush1.bf16.msra.mxu0 0
          %399 = vmatprep.subr.bf16.mxu0 0
          %400 = vmatpush1.bf16.msra.mxu0 0
          %401 = vmatprep.subr.bf16.mxu0 0
          %402 = vmatpush1.bf16.msra.mxu0 0
          %403 = vmatprep.subr.bf16.mxu0 0
          %404 = vmatpush1.bf16.msra.mxu0 0
          %405 = vmatprep.subr.bf16.mxu0 0
          %406 = vmatpush1.bf16.msra.mxu0 0
          %407 = vmatprep.subr.bf16.mxu0 0
          %408 = vmatpush1.bf16.msra.mxu0 0
          %409 = vmatprep.subr.bf16.mxu0 0
          %410 = vmatpush1.bf16.msra.mxu0 0
          %411 = vmatprep.subr.bf16.mxu0 0
          %412 = vmatpush1.bf16.msra.mxu0 0
          %413 = vmatprep.subr.bf16.mxu0 0
          %414 = vmatpush1.bf16.msra.mxu0 0
          %415 = vmatprep.subr.bf16.mxu0 0
          %416 = vmatpush1.bf16.msra.mxu0 0
          %417 = vmatprep.mubr.bf16.mxu0 0
          %418 = vmatmul.mubr.bf16.gmra.mrb[0].mxu0 %v383
          %v419 = vpop.f32.mrb[0].mxu0
          %v420 = vadd.f32 %v379, %v419
          %v421 = vpop.f32.mrb[0].mxu0
          %v422 = vadd.f32 %v379, %v421
          %v423 = vpop.f32.mrb[0].mxu0
          %v424 = vpop.f32.mrb[0].mxu0
          %425 = vdwg.mxu0
          %v426 = vmax.f32 %v420, 0.0
          %v427 = vmax.f32 %v422, 0.0
          %428 = vxpose.xlu0.b32.start [1/16] %v426, 128
          %429 = vxpose.xlu0.b32.cont [2/16] 0.0, 128
          %430 = vxpose.xlu0.b32.cont [3/16] 0.0, 128
          %431 = vxpose.xlu0.b32.cont [4/16] 0.0, 128
          %432 = vxpose.xlu0.b32.cont [5/16] 0.0, 128
          %433 = vxpose.xlu0.b32.cont [6/16] 0.0, 128
          %434 = vxpose.xlu0.b32.cont [7/16] 0.0, 128
          %435 = vxpose.xlu0.b32.cont [8/16] 0.0, 128
          %436 = vxpose.xlu0.b32.cont [9/16] 0.0, 128
          %437 = vxpose.xlu0.b32.cont [10/16] 0.0, 128
          %438 = vxpose.xlu0.b32.cont [11/16] 0.0, 128
          %439 = vxpose.xlu0.b32.cont [12/16] 0.0, 128
          %440 = vxpose.xlu0.b32.cont [13/16] 0.0, 128
          %441 = vxpose.xlu0.b32.cont [14/16] 0.0, 128
          %442 = vxpose.xlu0.b32.cont [15/16] 0.0, 128
          %443 = vxpose.xlu0.b32.end [16/16] 0.0, 128
          %v444 = vpop.trf.xlu0
          %v445 = vpop.trf.xlu0
          %v446 = vpop.trf.xlu0
          %v447 = vpop.trf.xlu0
          %v448 = vpop.trf.xlu0
          %v449 = vpop.trf.xlu0
          %v450 = vpop.trf.xlu0
          %v451 = vpop.trf.xlu0
          %v452 = vpop.trf.xlu0
          %v453 = vpop.trf.xlu0
          %v454 = vpop.trf.xlu0
          %v455 = vpop.trf.xlu0
          %v456 = vpop.trf.xlu0
          %v457 = vpop.trf.xlu0
          %v458 = vpop.trf.xlu0
          %v459 = vpop.trf.xlu0
          %460 = vxpose.xlu0.b32.start [1/16] %v427, 128
          %461 = vxpose.xlu0.b32.cont [2/16] 0.0, 128
          %462 = vxpose.xlu0.b32.cont [3/16] 0.0, 128
          %463 = vxpose.xlu0.b32.cont [4/16] 0.0, 128
          %464 = vxpose.xlu0.b32.cont [5/16] 0.0, 128
          %465 = vxpose.xlu0.b32.cont [6/16] 0.0, 128
          %466 = vxpose.xlu0.b32.cont [7/16] 0.0, 128
          %467 = vxpose.xlu0.b32.cont [8/16] 0.0, 128
          %468 = vxpose.xlu0.b32.cont [9/16] 0.0, 128
          %469 = vxpose.xlu0.b32.cont [10/16] 0.0, 128
          %470 = vxpose.xlu0.b32.cont [11/16] 0.0, 128
          %471 = vxpose.xlu0.b32.cont [12/16] 0.0, 128
          %472 = vxpose.xlu0.b32.cont [13/16] 0.0, 128
          %473 = vxpose.xlu0.b32.cont [14/16] 0.0, 128
          %474 = vxpose.xlu0.b32.cont [15/16] 0.0, 128
          %475 = vxpose.xlu0.b32.end [16/16] 0.0, 128
          %v476 = vpop.trf.xlu0
          %v477 = vpop.trf.xlu0
          %v478 = vpop.trf.xlu0
          %v479 = vpop.trf.xlu0
          %v480 = vpop.trf.xlu0
          %v481 = vpop.trf.xlu0
          %v482 = vpop.trf.xlu0
          %v483 = vpop.trf.xlu0
          %v484 = vpop.trf.xlu0
          %v485 = vpop.trf.xlu0
          %v486 = vpop.trf.xlu0
          %v487 = vpop.trf.xlu0
          %v488 = vpop.trf.xlu0
          %v489 = vpop.trf.xlu0
          %v490 = vpop.trf.xlu0
          %v491 = vpop.trf.xlu0
          %v492 = vpack.c.bf16 %v445, %v444
          %v493 = vpack.c.bf16 %v447, %v446
          %v494 = vpack.c.bf16 %v449, %v448
          %v495 = vpack.c.bf16 %v451, %v450
          %v496 = vpack.c.bf16 %v453, %v452
          %v497 = vpack.c.bf16 %v455, %v454
          %v498 = vpack.c.bf16 %v457, %v456
          %v499 = vpack.c.bf16 %v459, %v458
          %v500 = vpack.c.bf16 %v477, %v476
          %v501 = vpack.c.bf16 %v479, %v478
          %v502 = vpack.c.bf16 %v481, %v480
          %v503 = vpack.c.bf16 %v483, %v482
          %v504 = vpack.c.bf16 %v485, %v484
          %v505 = vpack.c.bf16 %v487, %v486
          %v506 = vpack.c.bf16 %v489, %v488
          %v507 = vpack.c.bf16 %v491, %v490
          %vm508 = vcmask 64512
          %509 = vst.msk [vmem:[#allocation2] sm:$0xff] %vm508, %v492
          %510 = vst.msk [vmem:[#allocation2 + $0x8] sm:$0xff] %vm508, %v493
          %511 = vst.msk [vmem:[#allocation2 + $0x10] sm:$0xff] %vm508, %v494
          %512 = vst.msk [vmem:[#allocation2 + $0x18] sm:$0xff] %vm508, %v495
          %513 = vst.msk [vmem:[#allocation2 + $0x20] sm:$0xff] %vm508, %v496
          %514 = vst.msk [vmem:[#allocation2 + $0x28] sm:$0xff] %vm508, %v497
          %515 = vst.msk [vmem:[#allocation2 + $0x30] sm:$0xff] %vm508, %v498
          %516 = vst.msk [vmem:[#allocation2 + $0x38] sm:$0xff] %vm508, %v499
          %517 = vst.msk [vmem:[#allocation2 + $0x40] sm:$0xff] %vm508, %v500
          %518 = vst.msk [vmem:[#allocation2 + $0x48] sm:$0xff] %vm508, %v501
          %519 = vst.msk [vmem:[#allocation2 + $0x50] sm:$0xff] %vm508, %v502
          %520 = vst.msk [vmem:[#allocation2 + $0x58] sm:$0xff] %vm508, %v503
          %521 = vst.msk [vmem:[#allocation2 + $0x60] sm:$0xff] %vm508, %v504
          %522 = vst.msk [vmem:[#allocation2 + $0x68] sm:$0xff] %vm508, %v505
          %523 = vst.msk [vmem:[#allocation2 + $0x70] sm:$0xff] %vm508, %v506
          %524 = vst.msk [vmem:[#allocation2 + $0x78] sm:$0xff] %vm508, %v507
          %525 = vst.msk [vmem:[#allocation3] sm:$0xff] %vm508, 0.0
          %526 = vst.msk [vmem:[#allocation3 + $0x8] sm:$0xff] %vm508, 0.0
          %527 = vst.msk [vmem:[#allocation3 + $0x10] sm:$0xff] %vm508, 0.0
          %528 = vst.msk [vmem:[#allocation3 + $0x18] sm:$0xff] %vm508, 0.0
          %529 = vst.msk [vmem:[#allocation3 + $0x20] sm:$0xff] %vm508, 0.0
          %530 = vst.msk [vmem:[#allocation3 + $0x28] sm:$0xff] %vm508, 0.0
          %531 = vst.msk [vmem:[#allocation3 + $0x30] sm:$0xff] %vm508, 0.0
          %532 = vst.msk [vmem:[#allocation3 + $0x38] sm:$0xff] %vm508, 0.0
          %533 = vst.msk [vmem:[#allocation3 + $0x40] sm:$0xff] %vm508, 0.0
          %534 = vst.msk [vmem:[#allocation3 + $0x48] sm:$0xff] %vm508, 0.0
          %535 = vst.msk [vmem:[#allocation3 + $0x50] sm:$0xff] %vm508, 0.0
          %536 = vst.msk [vmem:[#allocation3 + $0x58] sm:$0xff] %vm508, 0.0
          %537 = vst.msk [vmem:[#allocation3 + $0x60] sm:$0xff] %vm508, 0.0
          %538 = vst.msk [vmem:[#allocation3 + $0x68] sm:$0xff] %vm508, 0.0
          %539 = vst.msk [vmem:[#allocation3 + $0x70] sm:$0xff] %vm508, 0.0
          %540 = vst.msk [vmem:[#allocation3 + $0x78] sm:$0xff] %vm508, 0.0
          %541 = vst.msk [vmem:[#allocation3 + $0x80] sm:$0xff] %vm508, 0.0
          %542 = vst.msk [vmem:[#allocation3 + $0x88] sm:$0xff] %vm508, 0.0
          %543 = vst.msk [vmem:[#allocation3 + $0x90] sm:$0xff] %vm508, 0.0
          %544 = vst.msk [vmem:[#allocation3 + $0x98] sm:$0xff] %vm508, 0.0
          %545 = vst.msk [vmem:[#allocation3 + $0xa0] sm:$0xff] %vm508, 0.0
          %546 = vst.msk [vmem:[#allocation3 + $0xa8] sm:$0xff] %vm508, 0.0
          %547 = vst.msk [vmem:[#allocation3 + $0xb0] sm:$0xff] %vm508, 0.0
          %548 = vst.msk [vmem:[#allocation3 + $0xb8] sm:$0xff] %vm508, 0.0
          %549 = vst.msk [vmem:[#allocation3 + $0xc0] sm:$0xff] %vm508, 0.0
          %550 = vst.msk [vmem:[#allocation3 + $0xc8] sm:$0xff] %vm508, 0.0
          %551 = vst.msk [vmem:[#allocation3 + $0xd0] sm:$0xff] %vm508, 0.0
          %552 = vst.msk [vmem:[#allocation3 + $0xd8] sm:$0xff] %vm508, 0.0
          %553 = vst.msk [vmem:[#allocation3 + $0xe0] sm:$0xff] %vm508, 0.0
          %554 = vst.msk [vmem:[#allocation3 + $0xe8] sm:$0xff] %vm508, 0.0
          %555 = vst.msk [vmem:[#allocation3 + $0xf0] sm:$0xff] %vm508, 0.0
          %556 = vst.msk [vmem:[#allocation3 + $0xf8] sm:$0xff] %vm508, 0.0
        $region64: #{tpu_custom_call.1} parent=55 // pred_fallthru
          _
        %s557 = smul.u32 %s31, 128
        %s558 = sshra.s32 %s557, 7
        %s559 = sand.u32 %s557, 127
        %s560 = smul.addr %s558, 8
        %s561 = scalar_lea.vmem %s328, %s560 [#allocation4]
        %v562 = vld [vmem:[%s561] sm:$0xff]
        %v563 = vld [vmem:[%s561 + $0x10] sm:$0xff]
        %v564 = vpack.c.bf16 %v563, %v562
        %v565 = vld [vmem:[%s1] sm:$0xf]
        %v566 = vld [vmem:[%s5] sm:$0xff]
        %568 = vset.pattern.permute.xlu0 0
        %569 = vperm.xlu0 %568, %v566
        %v570 = vpop.permute.xlu0 %569
        %vm572 = vcmask 130048
        %v574 = vsel %vm572, %v565, 0
        %576 = vmatprep.subr.bf16.mxu0 0
        %577 = vmatpush1.bf16.msra.mxu0 %v564
        %578 = vmatprep.subr.bf16.mxu0 0
        %579 = vmatpush1.bf16.msra.mxu0 0
        %580 = vmatprep.subr.bf16.mxu0 0
        %581 = vmatpush1.bf16.msra.mxu0 0
        %582 = vmatprep.subr.bf16.mxu0 0
        %583 = vmatpush1.bf16.msra.mxu0 0
        %584 = vmatprep.subr.bf16.mxu0 0
        %585 = vmatpush1.bf16.msra.mxu0 0
        %586 = vmatprep.subr.bf16.mxu0 0
        %587 = vmatpush1.bf16.msra.mxu0 0
        %588 = vmatprep.subr.bf16.mxu0 0
        %589 = vmatpush1.bf16.msra.mxu0 0
        %590 = vmatprep.subr.bf16.mxu0 0
        %591 = vmatpush1.bf16.msra.mxu0 0
        %592 = vmatprep.subr.bf16.mxu0 0
        %593 = vmatpush1.bf16.msra.mxu0 0
        %594 = vmatprep.subr.bf16.mxu0 0
        %595 = vmatpush1.bf16.msra.mxu0 0
        %596 = vmatprep.subr.bf16.mxu0 0
        %597 = vmatpush1.bf16.msra.mxu0 0
        %598 = vmatprep.subr.bf16.mxu0 0
        %599 = vmatpush1.bf16.msra.mxu0 0
        %600 = vmatprep.subr.bf16.mxu0 0
        %601 = vmatpush1.bf16.msra.mxu0 0
        %602 = vmatprep.subr.bf16.mxu0 0
        %603 = vmatpush1.bf16.msra.mxu0 0
        %604 = vmatprep.subr.bf16.mxu0 0
        %605 = vmatpush1.bf16.msra.mxu0 0
        %606 = vmatprep.subr.bf16.mxu0 0
        %607 = vmatpush1.bf16.msra.mxu0 0
        %608 = vmatprep.mubr.bf16.mxu0 0
        %609 = vmatmul.mubr.bf16.gmra.mrb[0].mxu0 %v574
        %v610 = vpop.f32.mrb[0].mxu0
        %v611 = vadd.f32 %v570, %v610
        %v612 = vpop.f32.mrb[0].mxu0
        %v613 = vpop.f32.mrb[0].mxu0
        %v614 = vpop.f32.mrb[0].mxu0
        %615 = vdwg.mxu0
        %v616 = vmax.f32 %v611, 0.0
        %v617 = vld [vmem:[%s3] sm:$0xf]
        %v618 = vld [vmem:[%s7] sm:$0xff]
        %620 = vset.pattern.permute.xlu0 0
        %621 = vperm.xlu0 %620, %v618
        %v622 = vpop.permute.xlu0 %621
        %v625 = vsel %vm572, %v617, 0
        %627 = vmatprep.subr.bf16.mxu0 0
        %628 = vmatpush1.bf16.msra.mxu0 %v564
        %629 = vmatprep.subr.bf16.mxu0 0
        %630 = vmatpush1.bf16.msra.mxu0 0
        %631 = vmatprep.subr.bf16.mxu0 0
        %632 = vmatpush1.bf16.msra.mxu0 0
        %633 = vmatprep.subr.bf16.mxu0 0
        %634 = vmatpush1.bf16.msra.mxu0 0
        %635 = vmatprep.subr.bf16.mxu0 0
        %636 = vmatpush1.bf16.msra.mxu0 0
        %637 = vmatprep.subr.bf16.mxu0 0
        %638 = vmatpush1.bf16.msra.mxu0 0
        %639 = vmatprep.subr.bf16.mxu0 0
        %640 = vmatpush1.bf16.msra.mxu0 0
        %641 = vmatprep.subr.bf16.mxu0 0
        %642 = vmatpush1.bf16.msra.mxu0 0
        %643 = vmatprep.subr.bf16.mxu0 0
        %644 = vmatpush1.bf16.msra.mxu0 0
        %645 = vmatprep.subr.bf16.mxu0 0
        %646 = vmatpush1.bf16.msra.mxu0 0
        %647 = vmatprep.subr.bf16.mxu0 0
        %648 = vmatpush1.bf16.msra.mxu0 0
        %649 = vmatprep.subr.bf16.mxu0 0
        %650 = vmatpush1.bf16.msra.mxu0 0
        %651 = vmatprep.subr.bf16.mxu0 0
        %652 = vmatpush1.bf16.msra.mxu0 0
        %653 = vmatprep.subr.bf16.mxu0 0
        %654 = vmatpush1.bf16.msra.mxu0 0
        %655 = vmatprep.subr.bf16.mxu0 0
        %656 = vmatpush1.bf16.msra.mxu0 0
        %657 = vmatprep.subr.bf16.mxu0 0
        %658 = vmatpush1.bf16.msra.mxu0 0
        %659 = vmatprep.mubr.bf16.mxu0 0
        %660 = vmatmul.mubr.bf16.gmra.mrb[0].mxu0 %v625
        %v661 = vpop.f32.mrb[0].mxu0
        %v662 = vadd.f32 %v622, %v661
        %v663 = vpop.f32.mrb[0].mxu0
        %v664 = vpop.f32.mrb[0].mxu0
        %v665 = vpop.f32.mrb[0].mxu0
        %666 = vdwg.mxu0
        %v667 = vmax.f32 %v662, 0.0
        %v668 = vld [vmem:[#allocation2] sm:$0xff]
        %v669 = vld [vmem:[#allocation2 + $0x8] sm:$0xff]
        %v670 = vld [vmem:[#allocation2 + $0x10] sm:$0xff]
        %v671 = vld [vmem:[#allocation2 + $0x18] sm:$0xff]
        %v672 = vld [vmem:[#allocation2 + $0x20] sm:$0xff]
        %v673 = vld [vmem:[#allocation2 + $0x28] sm:$0xff]
        %v674 = vld [vmem:[#allocation2 + $0x30] sm:$0xff]
        %v675 = vld [vmem:[#allocation2 + $0x38] sm:$0xff]
        %v676 = vld [vmem:[#allocation2 + $0x40] sm:$0xff]
        %v677 = vld [vmem:[#allocation2 + $0x48] sm:$0xff]
        %v678 = vld [vmem:[#allocation2 + $0x50] sm:$0xff]
        %v679 = vld [vmem:[#allocation2 + $0x58] sm:$0xff]
        %v680 = vld [vmem:[#allocation2 + $0x60] sm:$0xff]
        %v681 = vld [vmem:[#allocation2 + $0x68] sm:$0xff]
        %v682 = vld [vmem:[#allocation2 + $0x70] sm:$0xff]
        %v683 = vld [vmem:[#allocation2 + $0x78] sm:$0xff]
        %v684 = vpack.c.bf16 %v616, %v616
        %vm685 = vcmask 64512
        %v687 = vsel %vm685, %v668, 0
        %v690 = vsel %vm685, %v669, 0
        %v693 = vsel %vm685, %v670, 0
        %v696 = vsel %vm685, %v671, 0
        %v699 = vsel %vm685, %v672, 0
        %v702 = vsel %vm685, %v673, 0
        %v705 = vsel %vm685, %v674, 0
        %v708 = vsel %vm685, %v675, 0
        %v711 = vsel %vm685, %v676, 0
        %v714 = vsel %vm685, %v677, 0
        %v717 = vsel %vm685, %v678, 0
        %v720 = vsel %vm685, %v679, 0
        %v723 = vsel %vm685, %v680, 0
        %v726 = vsel %vm685, %v681, 0
        %v729 = vsel %vm685, %v682, 0
        %v732 = vsel %vm685, %v683, 0
        %vm734 = vcmask 1043456
        %v736 = vsel %vm734, %v684, 0
        %738 = vmatprep.subr.bf16.mxu0 0
        %739 = vmatpush1.bf16.msra.mxu0 %v736
        %740 = vmatprep.subr.bf16.mxu0 0
        %741 = vmatpush1.bf16.msra.mxu0 0
        %742 = vmatprep.subr.bf16.mxu0 0
        %743 = vmatpush1.bf16.msra.mxu0 0
        %744 = vmatprep.subr.bf16.mxu0 0
        %745 = vmatpush1.bf16.msra.mxu0 0
        %746 = vmatprep.subr.bf16.mxu0 0
        %747 = vmatpush1.bf16.msra.mxu0 0
        %748 = vmatprep.subr.bf16.mxu0 0
        %749 = vmatpush1.bf16.msra.mxu0 0
        %750 = vmatprep.subr.bf16.mxu0 0
        %751 = vmatpush1.bf16.msra.mxu0 0
        %752 = vmatprep.subr.bf16.mxu0 0
        %753 = vmatpush1.bf16.msra.mxu0 0
        %754 = vmatprep.subr.bf16.mxu0 0
        %755 = vmatpush1.bf16.msra.mxu0 0
        %756 = vmatprep.subr.bf16.mxu0 0
        %757 = vmatpush1.bf16.msra.mxu0 0
        %758 = vmatprep.subr.bf16.mxu0 0
        %759 = vmatpush1.bf16.msra.mxu0 0
        %760 = vmatprep.subr.bf16.mxu0 0
        %761 = vmatpush1.bf16.msra.mxu0 0
        %762 = vmatprep.subr.bf16.mxu0 0
        %763 = vmatpush1.bf16.msra.mxu0 0
        %764 = vmatprep.subr.bf16.mxu0 0
        %765 = vmatpush1.bf16.msra.mxu0 0
        %766 = vmatprep.subr.bf16.mxu0 0
        %767 = vmatpush1.bf16.msra.mxu0 0
        %768 = vmatprep.subr.bf16.mxu0 0
        %769 = vmatpush1.bf16.msra.mxu0 0
        %770 = vmatprep.mubr.bf16.mxu0 0
        %771 = vmatmul.mubr.bf16.gmra.mrb[0].mxu0 %v687
        %v772 = vpop.f32.mrb[0].mxu0
        %v773 = vadd.f32 0.0, %v772
        %v774 = vpop.f32.mrb[0].mxu0
        %v775 = vpop.f32.mrb[0].mxu0
        %v776 = vadd.f32 0.0, %v775
        %v777 = vpop.f32.mrb[0].mxu0
        %778 = vmatprep.mubr.bf16.mxu0 0
        %779 = vmatmul.mubr.bf16.gmra.mrb[0].mxu0 %v690
        %v780 = vpop.f32.mrb[0].mxu0
        %v781 = vadd.f32 0.0, %v780
        %v782 = vpop.f32.mrb[0].mxu0
        %v783 = vpop.f32.mrb[0].mxu0
        %v784 = vadd.f32 0.0, %v783
        %v785 = vpop.f32.mrb[0].mxu0
        %786 = vmatprep.mubr.bf16.mxu0 0
        %787 = vmatmul.mubr.bf16.gmra.mrb[0].mxu0 %v693
        %v788 = vpop.f32.mrb[0].mxu0
        %v789 = vadd.f32 0.0, %v788
        %v790 = vpop.f32.mrb[0].mxu0
        %v791 = vpop.f32.mrb[0].mxu0
        %v792 = vadd.f32 0.0, %v791
        %v793 = vpop.f32.mrb[0].mxu0
        %794 = vmatprep.mubr.bf16.mxu0 0
        %795 = vmatmul.mubr.bf16.gmra.mrb[0].mxu0 %v696
        %v796 = vpop.f32.mrb[0].mxu0
        %v797 = vadd.f32 0.0, %v796
        %v798 = vpop.f32.mrb[0].mxu0
        %v799 = vpop.f32.mrb[0].mxu0
        %v800 = vadd.f32 0.0, %v799
        %v801 = vpop.f32.mrb[0].mxu0
        %802 = vmatprep.mubr.bf16.mxu0 0
        %803 = vmatmul.mubr.bf16.gmra.mrb[0].mxu0 %v699
        %v804 = vpop.f32.mrb[0].mxu0
        %v805 = vadd.f32 0.0, %v804
        %v806 = vpop.f32.mrb[0].mxu0
        %v807 = vpop.f32.mrb[0].mxu0
        %v808 = vadd.f32 0.0, %v807
        %v809 = vpop.f32.mrb[0].mxu0
        %810 = vmatprep.mubr.bf16.mxu0 0
        %811 = vmatmul.mubr.bf16.gmra.mrb[0].mxu0 %v702
        %v812 = vpop.f32.mrb[0].mxu0
        %v813 = vadd.f32 0.0, %v812
        %v814 = vpop.f32.mrb[0].mxu0
        %v815 = vpop.f32.mrb[0].mxu0
        %v816 = vadd.f32 0.0, %v815
        %v817 = vpop.f32.mrb[0].mxu0
        %818 = vmatprep.mubr.bf16.mxu0 0
        %819 = vmatmul.mubr.bf16.gmra.mrb[0].mxu0 %v705
        %v820 = vpop.f32.mrb[0].mxu0
        %v821 = vadd.f32 0.0, %v820
        %v822 = vpop.f32.mrb[0].mxu0
        %v823 = vpop.f32.mrb[0].mxu0
        %v824 = vadd.f32 0.0, %v823
        %v825 = vpop.f32.mrb[0].mxu0
        %826 = vmatprep.mubr.bf16.mxu0 0
        %827 = vmatmul.mubr.bf16.gmra.mrb[0].mxu0 %v708
        %v828 = vpop.f32.mrb[0].mxu0
        %v829 = vadd.f32 0.0, %v828
        %v830 = vpop.f32.mrb[0].mxu0
        %v831 = vpop.f32.mrb[0].mxu0
        %v832 = vadd.f32 0.0, %v831
        %v833 = vpop.f32.mrb[0].mxu0
        %834 = vmatprep.mubr.bf16.mxu0 0
        %835 = vmatmul.mubr.bf16.gmra.mrb[0].mxu0 %v711
        %v836 = vpop.f32.mrb[0].mxu0
        %v837 = vadd.f32 0.0, %v836
        %v838 = vpop.f32.mrb[0].mxu0
        %v839 = vpop.f32.mrb[0].mxu0
        %v840 = vadd.f32 0.0, %v839
        %v841 = vpop.f32.mrb[0].mxu0
        %842 = vmatprep.mubr.bf16.mxu0 0
        %843 = vmatmul.mubr.bf16.gmra.mrb[0].mxu0 %v714
        %v844 = vpop.f32.mrb[0].mxu0
        %v845 = vadd.f32 0.0, %v844
        %v846 = vpop.f32.mrb[0].mxu0
        %v847 = vpop.f32.mrb[0].mxu0
        %v848 = vadd.f32 0.0, %v847
        %v849 = vpop.f32.mrb[0].mxu0
        %850 = vmatprep.mubr.bf16.mxu0 0
        %851 = vmatmul.mubr.bf16.gmra.mrb[0].mxu0 %v717
        %v852 = vpop.f32.mrb[0].mxu0
        %v853 = vadd.f32 0.0, %v852
        %v854 = vpop.f32.mrb[0].mxu0
        %v855 = vpop.f32.mrb[0].mxu0
        %v856 = vadd.f32 0.0, %v855
        %v857 = vpop.f32.mrb[0].mxu0
        %858 = vmatprep.mubr.bf16.mxu0 0
        %859 = vmatmul.mubr.bf16.gmra.mrb[0].mxu0 %v720
        %v860 = vpop.f32.mrb[0].mxu0
        %v861 = vadd.f32 0.0, %v860
        %v862 = vpop.f32.mrb[0].mxu0
        %v863 = vpop.f32.mrb[0].mxu0
        %v864 = vadd.f32 0.0, %v863
        %v865 = vpop.f32.mrb[0].mxu0
        %866 = vmatprep.mubr.bf16.mxu0 0
        %867 = vmatmul.mubr.bf16.gmra.mrb[0].mxu0 %v723
        %v868 = vpop.f32.mrb[0].mxu0
        %v869 = vadd.f32 0.0, %v868
        %v870 = vpop.f32.mrb[0].mxu0
        %v871 = vpop.f32.mrb[0].mxu0
        %v872 = vadd.f32 0.0, %v871
        %v873 = vpop.f32.mrb[0].mxu0
        %874 = vmatprep.mubr.bf16.mxu0 0
        %875 = vmatmul.mubr.bf16.gmra.mrb[0].mxu0 %v726
        %v876 = vpop.f32.mrb[0].mxu0
        %v877 = vadd.f32 0.0, %v876
        %v878 = vpop.f32.mrb[0].mxu0
        %v879 = vpop.f32.mrb[0].mxu0
        %v880 = vadd.f32 0.0, %v879
        %v881 = vpop.f32.mrb[0].mxu0
        %882 = vmatprep.mubr.bf16.mxu0 0
        %883 = vmatmul.mubr.bf16.gmra.mrb[0].mxu0 %v729
        %v884 = vpop.f32.mrb[0].mxu0
        %v885 = vadd.f32 0.0, %v884
        %v886 = vpop.f32.mrb[0].mxu0
        %v887 = vpop.f32.mrb[0].mxu0
        %v888 = vadd.f32 0.0, %v887
        %v889 = vpop.f32.mrb[0].mxu0
        %890 = vmatprep.mubr.bf16.mxu0 0
        %891 = vmatmul.mubr.bf16.gmra.mrb[0].mxu0 %v732
        %v892 = vpop.f32.mrb[0].mxu0
        %v893 = vadd.f32 0.0, %v892
        %v894 = vpop.f32.mrb[0].mxu0
        %v895 = vpop.f32.mrb[0].mxu0
        %v896 = vadd.f32 0.0, %v895
        %v897 = vpop.f32.mrb[0].mxu0
        %898 = vdwg.mxu0
        %v899 = vmax.f32 %v773, %v789
        %v900 = vmax.f32 %v776, %v792
        %v901 = vmax.f32 %v781, %v797
        %v902 = vmax.f32 %v784, %v800
        %v903 = vmax.f32 %v899, %v805
        %v904 = vmax.f32 %v900, %v808
        %v905 = vmax.f32 %v901, %v813
        %v906 = vmax.f32 %v902, %v816
        %v907 = vmax.f32 %v903, %v821
        %v908 = vmax.f32 %v904, %v824
        %v909 = vmax.f32 %v905, %v829
        %v910 = vmax.f32 %v906, %v832
        %v911 = vmax.f32 %v907, %v837
        %v912 = vmax.f32 %v908, %v840
        %v913 = vmax.f32 %v909, %v845
        %v914 = vmax.f32 %v910, %v848
        %v915 = vmax.f32 %v911, %v853
        %v916 = vmax.f32 %v912, %v856
        %v917 = vmax.f32 %v913, %v861
        %v918 = vmax.f32 %v914, %v864
        %v919 = vmax.f32 %v915, %v869
        %v920 = vmax.f32 %v916, %v872
        %v921 = vmax.f32 %v917, %v877
        %v922 = vmax.f32 %v918, %v880
        %v923 = vmax.f32 %v919, %v885
        %v924 = vmax.f32 %v920, %v888
        %v925 = vmax.f32 %v921, %v893
        %v926 = vmax.f32 %v922, %v896
        %v927 = vmax.f32 %v923, %v924
        %v928 = vmax.f32 %v925, %v926
        %v929 = vmax.f32 %v927, %v928
        %v930 = vrot.slane %v929, 4
        %v931 = vmax.f32 %v929, %v930
        %v932 = vrot.slane %v931, 2
        %v933 = vmax.f32 %v931, %v932
        %v934 = vrot.slane %v933, 1
        %v935 = vmax.f32 %v933, %v934
        %v936 = vsub.f32 %v773, %v935
        %v937 = vsub.f32 %v776, %v935
        %v938 = vsub.f32 %v781, %v935
        %v939 = vsub.f32 %v784, %v935
        %v940 = vsub.f32 %v789, %v935
        %v941 = vsub.f32 %v792, %v935
        %v942 = vsub.f32 %v797, %v935
        %v943 = vsub.f32 %v800, %v935
        %v944 = vsub.f32 %v805, %v935
        %v945 = vsub.f32 %v808, %v935
        %v946 = vsub.f32 %v813, %v935
        %v947 = vsub.f32 %v816, %v935
        %v948 = vsub.f32 %v821, %v935
        %v949 = vsub.f32 %v824, %v935
        %v950 = vsub.f32 %v829, %v935
        %v951 = vsub.f32 %v832, %v935
        %v952 = vsub.f32 %v837, %v935
        %v953 = vsub.f32 %v840, %v935
        %v954 = vsub.f32 %v845, %v935
        %v955 = vsub.f32 %v848, %v935
        %v956 = vsub.f32 %v853, %v935
        %v957 = vsub.f32 %v856, %v935
        %v958 = vsub.f32 %v861, %v935
        %v959 = vsub.f32 %v864, %v935
        %v960 = vsub.f32 %v869, %v935
        %v961 = vsub.f32 %v872, %v935
        %v962 = vsub.f32 %v877, %v935
        %v963 = vsub.f32 %v880, %v935
        %v964 = vsub.f32 %v885, %v935
        %v965 = vsub.f32 %v888, %v935
        %v966 = vsub.f32 %v893, %v935
        %v967 = vsub.f32 %v896, %v935
        %v968 = vmul.f32 %v936, 1.442695
        %v969 = vpow.pop %v968
        %v970 = vmul.f32 %v937, 1.442695
        %v971 = vpow.pop %v970
        %v972 = vmul.f32 %v938, 1.442695
        %v973 = vpow.pop %v972
        %v974 = vmul.f32 %v939, 1.442695
        %v975 = vpow.pop %v974
        %v976 = vmul.f32 %v940, 1.442695
        %v977 = vpow.pop %v976
        %v978 = vmul.f32 %v941, 1.442695
        %v979 = vpow.pop %v978
        %v980 = vmul.f32 %v942, 1.442695
        %v981 = vpow.pop %v980
        %v982 = vmul.f32 %v943, 1.442695
        %v983 = vpow.pop %v982
        %v984 = vmul.f32 %v944, 1.442695
        %v985 = vpow.pop %v984
        %v986 = vmul.f32 %v945, 1.442695
        %v987 = vpow.pop %v986
        %v988 = vmul.f32 %v946, 1.442695
        %v989 = vpow.pop %v988
        %v990 = vmul.f32 %v947, 1.442695
        %v991 = vpow.pop %v990
        %v992 = vmul.f32 %v948, 1.442695
        %v993 = vpow.pop %v992
        %v994 = vmul.f32 %v949, 1.442695
        %v995 = vpow.pop %v994
        %v996 = vmul.f32 %v950, 1.442695
        %v997 = vpow.pop %v996
        %v998 = vmul.f32 %v951, 1.442695
        %v999 = vpow.pop %v998
        %v1000 = vmul.f32 %v952, 1.442695
        %v1001 = vpow.pop %v1000
        %v1002 = vmul.f32 %v953, 1.442695
        %v1003 = vpow.pop %v1002
        %v1004 = vmul.f32 %v954, 1.442695
        %v1005 = vpow.pop %v1004
        %v1006 = vmul.f32 %v955, 1.442695
        %v1007 = vpow.pop %v1006
        %v1008 = vmul.f32 %v956, 1.442695
        %v1009 = vpow.pop %v1008
        %v1010 = vmul.f32 %v957, 1.442695
        %v1011 = vpow.pop %v1010
        %v1012 = vmul.f32 %v958, 1.442695
        %v1013 = vpow.pop %v1012
        %v1014 = vmul.f32 %v959, 1.442695
        %v1015 = vpow.pop %v1014
        %v1016 = vmul.f32 %v960, 1.442695
        %v1017 = vpow.pop %v1016
        %v1018 = vmul.f32 %v961, 1.442695
        %v1019 = vpow.pop %v1018
        %v1020 = vmul.f32 %v962, 1.442695
        %v1021 = vpow.pop %v1020
        %v1022 = vmul.f32 %v963, 1.442695
        %v1023 = vpow.pop %v1022
        %v1024 = vmul.f32 %v964, 1.442695
        %v1025 = vpow.pop %v1024
        %v1026 = vmul.f32 %v965, 1.442695
        %v1027 = vpow.pop %v1026
        %v1028 = vmul.f32 %v966, 1.442695
        %v1029 = vpow.pop %v1028
        %v1030 = vmul.f32 %v967, 1.442695
        %v1031 = vpow.pop %v1030
        %v1032 = vadd.f32 %v969, %v971
        %v1033 = vadd.f32 %v1032, %v973
        %v1034 = vadd.f32 %v1033, %v975
        %v1035 = vadd.f32 %v1034, %v977
        %v1036 = vadd.f32 %v1035, %v979
        %v1037 = vadd.f32 %v1036, %v981
        %v1038 = vadd.f32 %v1037, %v983
        %v1039 = vadd.f32 %v1038, %v985
        %v1040 = vadd.f32 %v1039, %v987
        %v1041 = vadd.f32 %v1040, %v989
        %v1042 = vadd.f32 %v1041, %v991
        %v1043 = vadd.f32 %v1042, %v993
        %v1044 = vadd.f32 %v1043, %v995
        %v1045 = vadd.f32 %v1044, %v997
        %v1046 = vadd.f32 %v1045, %v999
        %v1047 = vadd.f32 %v1046, %v1001
        %v1048 = vadd.f32 %v1047, %v1003
        %v1049 = vadd.f32 %v1048, %v1005
        %v1050 = vadd.f32 %v1049, %v1007
        %v1051 = vadd.f32 %v1050, %v1009
        %v1052 = vadd.f32 %v1051, %v1011
        %v1053 = vadd.f32 %v1052, %v1013
        %v1054 = vadd.f32 %v1053, %v1015
        %v1055 = vadd.f32 %v1054, %v1017
        %v1056 = vadd.f32 %v1055, %v1019
        %v1057 = vadd.f32 %v1056, %v1021
        %v1058 = vadd.f32 %v1057, %v1023
        %v1059 = vadd.f32 %v1058, %v1025
        %v1060 = vadd.f32 %v1059, %v1027
        %v1061 = vadd.f32 %v1060, %v1029
        %v1062 = vadd.f32 %v1061, %v1031
        %v1063 = vrot.slane %v1062, 4
        %v1064 = vadd.f32 %v1062, %v1063
        %v1065 = vrot.slane %v1064, 2
        %v1066 = vadd.f32 %v1064, %v1065
        %v1067 = vrot.slane %v1066, 1
        %v1068 = vadd.f32 %v1066, %v1067
        %v1069 = vrcp.pop %v1068
        %v1070 = vmul.f32 %v667, %v1069
        %1071 = vxpose.xlu0.b32.start [1/16] %v1070, 128
        %1072 = vxpose.xlu0.b32.cont [2/16] 0.0, 128
        %1073 = vxpose.xlu0.b32.cont [3/16] 0.0, 128
        %1074 = vxpose.xlu0.b32.cont [4/16] 0.0, 128
        %1075 = vxpose.xlu0.b32.cont [5/16] 0.0, 128
        %1076 = vxpose.xlu0.b32.cont [6/16] 0.0, 128
        %1077 = vxpose.xlu0.b32.cont [7/16] 0.0, 128
        %1078 = vxpose.xlu0.b32.cont [8/16] 0.0, 128
        %1079 = vxpose.xlu0.b32.cont [9/16] 0.0, 128
        %1080 = vxpose.xlu0.b32.cont [10/16] 0.0, 128
        %1081 = vxpose.xlu0.b32.cont [11/16] 0.0, 128
        %1082 = vxpose.xlu0.b32.cont [12/16] 0.0, 128
        %1083 = vxpose.xlu0.b32.cont [13/16] 0.0, 128
        %1084 = vxpose.xlu0.b32.cont [14/16] 0.0, 128
        %1085 = vxpose.xlu0.b32.cont [15/16] 0.0, 128
        %1086 = vxpose.xlu0.b32.end [16/16] 0.0, 128
        %v1087 = vpop.trf.xlu0
        %v1088 = vpop.trf.xlu0
        %v1089 = vpop.trf.xlu0
        %v1090 = vpop.trf.xlu0
        %v1091 = vpop.trf.xlu0
        %v1092 = vpop.trf.xlu0
        %v1093 = vpop.trf.xlu0
        %v1094 = vpop.trf.xlu0
        %v1095 = vpop.trf.xlu0
        %v1096 = vpop.trf.xlu0
        %v1097 = vpop.trf.xlu0
        %v1098 = vpop.trf.xlu0
        %v1099 = vpop.trf.xlu0
        %v1100 = vpop.trf.xlu0
        %v1101 = vpop.trf.xlu0
        %v1102 = vpop.trf.xlu0
        %v1103 = vpack.c.bf16 %v1088, %v1087
        %v1104 = vpack.c.bf16 %v1090, %v1089
        %v1105 = vpack.c.bf16 %v1092, %v1091
        %v1106 = vpack.c.bf16 %v1094, %v1093
        %v1107 = vpack.c.bf16 %v1096, %v1095
        %v1108 = vpack.c.bf16 %v1098, %v1097
        %v1109 = vpack.c.bf16 %v1100, %v1099
        %v1110 = vpack.c.bf16 %v1102, %v1101
        %v1111 = vld [vmem:[#allocation3] sm:$0xff]
        %v1112 = vld [vmem:[#allocation3 + $0x8] sm:$0xff]
        %v1113 = vld [vmem:[#allocation3 + $0x10] sm:$0xff]
        %v1114 = vld [vmem:[#allocation3 + $0x18] sm:$0xff]
        %v1115 = vld [vmem:[#allocation3 + $0x20] sm:$0xff]
        %v1116 = vld [vmem:[#allocation3 + $0x28] sm:$0xff]
        %v1117 = vld [vmem:[#allocation3 + $0x30] sm:$0xff]
        %v1118 = vld [vmem:[#allocation3 + $0x38] sm:$0xff]
        %v1119 = vld [vmem:[#allocation3 + $0x40] sm:$0xff]
        %v1120 = vld [vmem:[#allocation3 + $0x48] sm:$0xff]
        %v1121 = vld [vmem:[#allocation3 + $0x50] sm:$0xff]
        %v1122 = vld [vmem:[#allocation3 + $0x58] sm:$0xff]
        %v1123 = vld [vmem:[#allocation3 + $0x60] sm:$0xff]
        %v1124 = vld [vmem:[#allocation3 + $0x68] sm:$0xff]
        %v1125 = vld [vmem:[#allocation3 + $0x70] sm:$0xff]
        %v1126 = vld [vmem:[#allocation3 + $0x78] sm:$0xff]
        %v1127 = vld [vmem:[#allocation3 + $0x80] sm:$0xff]
        %v1128 = vld [vmem:[#allocation3 + $0x88] sm:$0xff]
        %v1129 = vld [vmem:[#allocation3 + $0x90] sm:$0xff]
        %v1130 = vld [vmem:[#allocation3 + $0x98] sm:$0xff]
        %v1131 = vld [vmem:[#allocation3 + $0xa0] sm:$0xff]
        %v1132 = vld [vmem:[#allocation3 + $0xa8] sm:$0xff]
        %v1133 = vld [vmem:[#allocation3 + $0xb0] sm:$0xff]
        %v1134 = vld [vmem:[#allocation3 + $0xb8] sm:$0xff]
        %v1135 = vld [vmem:[#allocation3 + $0xc0] sm:$0xff]
        %v1136 = vld [vmem:[#allocation3 + $0xc8] sm:$0xff]
        %v1137 = vld [vmem:[#allocation3 + $0xd0] sm:$0xff]
        %v1138 = vld [vmem:[#allocation3 + $0xd8] sm:$0xff]
        %v1139 = vld [vmem:[#allocation3 + $0xe0] sm:$0xff]
        %v1140 = vld [vmem:[#allocation3 + $0xe8] sm:$0xff]
        %v1141 = vld [vmem:[#allocation3 + $0xf0] sm:$0xff]
        %v1142 = vld [vmem:[#allocation3 + $0xf8] sm:$0xff]
        %v1143 = vpack.c.bf16 %v971, %v969
        %v1144 = vpack.c.bf16 %v975, %v973
        %v1145 = vpack.c.bf16 %v979, %v977
        %v1146 = vpack.c.bf16 %v983, %v981
        %v1147 = vpack.c.bf16 %v987, %v985
        %v1148 = vpack.c.bf16 %v991, %v989
        %v1149 = vpack.c.bf16 %v995, %v993
        %v1150 = vpack.c.bf16 %v999, %v997
        %v1151 = vpack.c.bf16 %v1003, %v1001
        %v1152 = vpack.c.bf16 %v1007, %v1005
        %v1153 = vpack.c.bf16 %v1011, %v1009
        %v1154 = vpack.c.bf16 %v1015, %v1013
        %v1155 = vpack.c.bf16 %v1019, %v1017
        %v1156 = vpack.c.bf16 %v1023, %v1021
        %v1157 = vpack.c.bf16 %v1027, %v1025
        %v1158 = vpack.c.bf16 %v1031, %v1029
        %1159 = vmatprep.subr.bf16.mxu0 0
        %1160 = vmatpush1.bf16.msra.mxu0 %v1103
        %1161 = vmatprep.subr.bf16.mxu0 0
        %1162 = vmatpush1.bf16.msra.mxu0 %v1104
        %1163 = vmatprep.subr.bf16.mxu0 0
        %1164 = vmatpush1.bf16.msra.mxu0 %v1105
        %1165 = vmatprep.subr.bf16.mxu0 0
        %1166 = vmatpush1.bf16.msra.mxu0 %v1106
        %1167 = vmatprep.subr.bf16.mxu0 0
        %1168 = vmatpush1.bf16.msra.mxu0 %v1107
        %1169 = vmatprep.subr.bf16.mxu0 0
        %1170 = vmatpush1.bf16.msra.mxu0 %v1108
        %1171 = vmatprep.subr.bf16.mxu0 0
        %1172 = vmatpush1.bf16.msra.mxu0 %v1109
        %1173 = vmatprep.subr.bf16.mxu0 0
        %1174 = vmatpush1.bf16.msra.mxu0 %v1110
        %1175 = vmatprep.subr.bf16.mxu0 0
        %1176 = vmatpush1.bf16.msra.mxu0 0
        %1177 = vmatprep.subr.bf16.mxu0 0
        %1178 = vmatpush1.bf16.msra.mxu0 0
        %1179 = vmatprep.subr.bf16.mxu0 0
        %1180 = vmatpush1.bf16.msra.mxu0 0
        %1181 = vmatprep.subr.bf16.mxu0 0
        %1182 = vmatpush1.bf16.msra.mxu0 0
        %1183 = vmatprep.subr.bf16.mxu0 0
        %1184 = vmatpush1.bf16.msra.mxu0 0
        %1185 = vmatprep.subr.bf16.mxu0 0
        %1186 = vmatpush1.bf16.msra.mxu0 0
        %1187 = vmatprep.subr.bf16.mxu0 0
        %1188 = vmatpush1.bf16.msra.mxu0 0
        %1189 = vmatprep.subr.bf16.mxu0 0
        %1190 = vmatpush1.bf16.msra.mxu0 0
        %1191 = vmatprep.mubr.bf16.mxu0 0
        %1192 = vmatmul.mubr.bf16.gmra.mrb[0].mxu0 %v1143
        %v1193 = vpop.f32.mrb[0].mxu0
        %v1194 = vadd.f32 0.0, %v1193
        %v1195 = vpop.f32.mrb[0].mxu0
        %v1196 = vpop.f32.mrb[0].mxu0
        %v1197 = vadd.f32 0.0, %v1196
        %v1198 = vpop.f32.mrb[0].mxu0
        %1199 = vmatprep.mubr.bf16.mxu0 0
        %1200 = vmatmul.mubr.bf16.gmra.mrb[0].mxu0 %v1144
        %v1201 = vpop.f32.mrb[0].mxu0
        %v1202 = vadd.f32 0.0, %v1201
        %v1203 = vpop.f32.mrb[0].mxu0
        %v1204 = vpop.f32.mrb[0].mxu0
        %v1205 = vadd.f32 0.0, %v1204
        %v1206 = vpop.f32.mrb[0].mxu0
        %1207 = vmatprep.mubr.bf16.mxu0 0
        %1208 = vmatmul.mubr.bf16.gmra.mrb[0].mxu0 %v1145
        %v1209 = vpop.f32.mrb[0].mxu0
        %v1210 = vadd.f32 0.0, %v1209
        %v1211 = vpop.f32.mrb[0].mxu0
        %v1212 = vpop.f32.mrb[0].mxu0
        %v1213 = vadd.f32 0.0, %v1212
        %v1214 = vpop.f32.mrb[0].mxu0
        %1215 = vmatprep.mubr.bf16.mxu0 0
        %1216 = vmatmul.mubr.bf16.gmra.mrb[0].mxu0 %v1146
        %v1217 = vpop.f32.mrb[0].mxu0
        %v1218 = vadd.f32 0.0, %v1217
        %v1219 = vpop.f32.mrb[0].mxu0
        %v1220 = vpop.f32.mrb[0].mxu0
        %v1221 = vadd.f32 0.0, %v1220
        %v1222 = vpop.f32.mrb[0].mxu0
        %1223 = vmatprep.mubr.bf16.mxu0 0
        %1224 = vmatmul.mubr.bf16.gmra.mrb[0].mxu0 %v1147
        %v1225 = vpop.f32.mrb[0].mxu0
        %v1226 = vadd.f32 0.0, %v1225
        %v1227 = vpop.f32.mrb[0].mxu0
        %v1228 = vpop.f32.mrb[0].mxu0
        %v1229 = vadd.f32 0.0, %v1228
        %v1230 = vpop.f32.mrb[0].mxu0
        %1231 = vmatprep.mubr.bf16.mxu0 0
        %1232 = vmatmul.mubr.bf16.gmra.mrb[0].mxu0 %v1148
        %v1233 = vpop.f32.mrb[0].mxu0
        %v1234 = vadd.f32 0.0, %v1233
        %v1235 = vpop.f32.mrb[0].mxu0
        %v1236 = vpop.f32.mrb[0].mxu0
        %v1237 = vadd.f32 0.0, %v1236
        %v1238 = vpop.f32.mrb[0].mxu0
        %1239 = vmatprep.mubr.bf16.mxu0 0
        %1240 = vmatmul.mubr.bf16.gmra.mrb[0].mxu0 %v1149
        %v1241 = vpop.f32.mrb[0].mxu0
        %v1242 = vadd.f32 0.0, %v1241
        %v1243 = vpop.f32.mrb[0].mxu0
        %v1244 = vpop.f32.mrb[0].mxu0
        %v1245 = vadd.f32 0.0, %v1244
        %v1246 = vpop.f32.mrb[0].mxu0
        %1247 = vmatprep.mubr.bf16.mxu0 0
        %1248 = vmatmul.mubr.bf16.gmra.mrb[0].mxu0 %v1150
        %v1249 = vpop.f32.mrb[0].mxu0
        %v1250 = vadd.f32 0.0, %v1249
        %v1251 = vpop.f32.mrb[0].mxu0
        %v1252 = vpop.f32.mrb[0].mxu0
        %v1253 = vadd.f32 0.0, %v1252
        %v1254 = vpop.f32.mrb[0].mxu0
        %1255 = vmatprep.mubr.bf16.mxu0 0
        %1256 = vmatmul.mubr.bf16.gmra.mrb[0].mxu0 %v1151
        %v1257 = vpop.f32.mrb[0].mxu0
        %v1258 = vadd.f32 0.0, %v1257
        %v1259 = vpop.f32.mrb[0].mxu0
        %v1260 = vpop.f32.mrb[0].mxu0
        %v1261 = vadd.f32 0.0, %v1260
        %v1262 = vpop.f32.mrb[0].mxu0
        %1263 = vmatprep.mubr.bf16.mxu0 0
        %1264 = vmatmul.mubr.bf16.gmra.mrb[0].mxu0 %v1152
        %v1265 = vpop.f32.mrb[0].mxu0
        %v1266 = vadd.f32 0.0, %v1265
        %v1267 = vpop.f32.mrb[0].mxu0
        %v1268 = vpop.f32.mrb[0].mxu0
        %v1269 = vadd.f32 0.0, %v1268
        %v1270 = vpop.f32.mrb[0].mxu0
        %1271 = vmatprep.mubr.bf16.mxu0 0
        %1272 = vmatmul.mubr.bf16.gmra.mrb[0].mxu0 %v1153
        %v1273 = vpop.f32.mrb[0].mxu0
        %v1274 = vadd.f32 0.0, %v1273
        %v1275 = vpop.f32.mrb[0].mxu0
        %v1276 = vpop.f32.mrb[0].mxu0
        %v1277 = vadd.f32 0.0, %v1276
        %v1278 = vpop.f32.mrb[0].mxu0
        %1279 = vmatprep.mubr.bf16.mxu0 0
        %1280 = vmatmul.mubr.bf16.gmra.mrb[0].mxu0 %v1154
        %v1281 = vpop.f32.mrb[0].mxu0
        %v1282 = vadd.f32 0.0, %v1281
        %v1283 = vpop.f32.mrb[0].mxu0
        %v1284 = vpop.f32.mrb[0].mxu0
        %v1285 = vadd.f32 0.0, %v1284
        %v1286 = vpop.f32.mrb[0].mxu0
        %1287 = vmatprep.mubr.bf16.mxu0 0
        %1288 = vmatmul.mubr.bf16.gmra.mrb[0].mxu0 %v1155
        %v1289 = vpop.f32.mrb[0].mxu0
        %v1290 = vadd.f32 0.0, %v1289
        %v1291 = vpop.f32.mrb[0].mxu0
        %v1292 = vpop.f32.mrb[0].mxu0
        %v1293 = vadd.f32 0.0, %v1292
        %v1294 = vpop.f32.mrb[0].mxu0
        %1295 = vmatprep.mubr.bf16.mxu0 0
        %1296 = vmatmul.mubr.bf16.gmra.mrb[0].mxu0 %v1156
        %v1297 = vpop.f32.mrb[0].mxu0
        %v1298 = vadd.f32 0.0, %v1297
        %v1299 = vpop.f32.mrb[0].mxu0
        %v1300 = vpop.f32.mrb[0].mxu0
        %v1301 = vadd.f32 0.0, %v1300
        %v1302 = vpop.f32.mrb[0].mxu0
        %1303 = vmatprep.mubr.bf16.mxu0 0
        %1304 = vmatmul.mubr.bf16.gmra.mrb[0].mxu0 %v1157
        %v1305 = vpop.f32.mrb[0].mxu0
        %v1306 = vadd.f32 0.0, %v1305
        %v1307 = vpop.f32.mrb[0].mxu0
        %v1308 = vpop.f32.mrb[0].mxu0
        %v1309 = vadd.f32 0.0, %v1308
        %v1310 = vpop.f32.mrb[0].mxu0
        %1311 = vmatprep.mubr.bf16.mxu0 0
        %1312 = vmatmul.mubr.bf16.gmra.mrb[0].mxu0 %v1158
        %v1313 = vpop.f32.mrb[0].mxu0
        %v1314 = vadd.f32 0.0, %v1313
        %v1315 = vpop.f32.mrb[0].mxu0
        %v1316 = vpop.f32.mrb[0].mxu0
        %v1317 = vadd.f32 0.0, %v1316
        %v1318 = vpop.f32.mrb[0].mxu0
        %1319 = vdwg.mxu0
        %v1320 = vadd.f32 %v1111, %v1194
        %v1321 = vadd.f32 %v1112, %v1197
        %v1322 = vadd.f32 %v1113, %v1202
        %v1323 = vadd.f32 %v1114, %v1205
        %v1324 = vadd.f32 %v1115, %v1210
        %v1325 = vadd.f32 %v1116, %v1213
        %v1326 = vadd.f32 %v1117, %v1218
        %v1327 = vadd.f32 %v1118, %v1221
        %v1328 = vadd.f32 %v1119, %v1226
        %v1329 = vadd.f32 %v1120, %v1229
        %v1330 = vadd.f32 %v1121, %v1234
        %v1331 = vadd.f32 %v1122, %v1237
        %v1332 = vadd.f32 %v1123, %v1242
        %v1333 = vadd.f32 %v1124, %v1245
        %v1334 = vadd.f32 %v1125, %v1250
        %v1335 = vadd.f32 %v1126, %v1253
        %v1336 = vadd.f32 %v1127, %v1258
        %v1337 = vadd.f32 %v1128, %v1261
        %v1338 = vadd.f32 %v1129, %v1266
        %v1339 = vadd.f32 %v1130, %v1269
        %v1340 = vadd.f32 %v1131, %v1274
        %v1341 = vadd.f32 %v1132, %v1277
        %v1342 = vadd.f32 %v1133, %v1282
        %v1343 = vadd.f32 %v1134, %v1285
        %v1344 = vadd.f32 %v1135, %v1290
        %v1345 = vadd.f32 %v1136, %v1293
        %v1346 = vadd.f32 %v1137, %v1298
        %v1347 = vadd.f32 %v1138, %v1301
        %v1348 = vadd.f32 %v1139, %v1306
        %v1349 = vadd.f32 %v1140, %v1309
        %v1350 = vadd.f32 %v1141, %v1314
        %v1351 = vadd.f32 %v1142, %v1317
        %1352 = vst.msk [vmem:[#allocation3] sm:$0xff] %vm685, %v1320
        %1353 = vst.msk [vmem:[#allocation3 + $0x8] sm:$0xff] %vm685, %v1321
        %1354 = vst.msk [vmem:[#allocation3 + $0x10] sm:$0xff] %vm685, %v1322
        %1355 = vst.msk [vmem:[#allocation3 + $0x18] sm:$0xff] %vm685, %v1323
        %1356 = vst.msk [vmem:[#allocation3 + $0x20] sm:$0xff] %vm685, %v1324
        %1357 = vst.msk [vmem:[#allocation3 + $0x28] sm:$0xff] %vm685, %v1325
        %1358 = vst.msk [vmem:[#allocation3 + $0x30] sm:$0xff] %vm685, %v1326
        %1359 = vst.msk [vmem:[#allocation3 + $0x38] sm:$0xff] %vm685, %v1327
        %1360 = vst.msk [vmem:[#allocation3 + $0x40] sm:$0xff] %vm685, %v1328
        %1361 = vst.msk [vmem:[#allocation3 + $0x48] sm:$0xff] %vm685, %v1329
        %1362 = vst.msk [vmem:[#allocation3 + $0x50] sm:$0xff] %vm685, %v1330
        %1363 = vst.msk [vmem:[#allocation3 + $0x58] sm:$0xff] %vm685, %v1331
        %1364 = vst.msk [vmem:[#allocation3 + $0x60] sm:$0xff] %vm685, %v1332
        %1365 = vst.msk [vmem:[#allocation3 + $0x68] sm:$0xff] %vm685, %v1333
        %1366 = vst.msk [vmem:[#allocation3 + $0x70] sm:$0xff] %vm685, %v1334
        %1367 = vst.msk [vmem:[#allocation3 + $0x78] sm:$0xff] %vm685, %v1335
        %1368 = vst.msk [vmem:[#allocation3 + $0x80] sm:$0xff] %vm685, %v1336
        %1369 = vst.msk [vmem:[#allocation3 + $0x88] sm:$0xff] %vm685, %v1337
        %1370 = vst.msk [vmem:[#allocation3 + $0x90] sm:$0xff] %vm685, %v1338
        %1371 = vst.msk [vmem:[#allocation3 + $0x98] sm:$0xff] %vm685, %v1339
        %1372 = vst.msk [vmem:[#allocation3 + $0xa0] sm:$0xff] %vm685, %v1340
        %1373 = vst.msk [vmem:[#allocation3 + $0xa8] sm:$0xff] %vm685, %v1341
        %1374 = vst.msk [vmem:[#allocation3 + $0xb0] sm:$0xff] %vm685, %v1342
        %1375 = vst.msk [vmem:[#allocation3 + $0xb8] sm:$0xff] %vm685, %v1343
        %1376 = vst.msk [vmem:[#allocation3 + $0xc0] sm:$0xff] %vm685, %v1344
        %1377 = vst.msk [vmem:[#allocation3 + $0xc8] sm:$0xff] %vm685, %v1345
        %1378 = vst.msk [vmem:[#allocation3 + $0xd0] sm:$0xff] %vm685, %v1346
        %1379 = vst.msk [vmem:[#allocation3 + $0xd8] sm:$0xff] %vm685, %v1347
        %1380 = vst.msk [vmem:[#allocation3 + $0xe0] sm:$0xff] %vm685, %v1348
        %1381 = vst.msk [vmem:[#allocation3 + $0xe8] sm:$0xff] %vm685, %v1349
        %1382 = vst.msk [vmem:[#allocation3 + $0xf0] sm:$0xff] %vm685, %v1350
        %1383 = vst.msk [vmem:[#allocation3 + $0xf8] sm:$0xff] %vm685, %v1351
        %p1384 = scmp.eq.s32.totalorder %s31, 1
        // Predicated region
        $region65: #{tpu_custom_call.1} parent=55 // pred_check
          %p1385 = pneg %p1384
        $region66: #{tpu_custom_call.1} parent=55 // pred_check_branch
          %1387 = sbr.rel (%p1385) target = $region68
        $region67: #{tpu_custom_call.1} parent=55 // pred_region
          %v1388 = vld [vmem:[#allocation3] sm:$0xff]
          %v1389 = vld [vmem:[#allocation3 + $0x8] sm:$0xff]
          %v1390 = vld [vmem:[#allocation3 + $0x10] sm:$0xff]
          %v1391 = vld [vmem:[#allocation3 + $0x18] sm:$0xff]
          %v1392 = vld [vmem:[#allocation3 + $0x20] sm:$0xff]
          %v1393 = vld [vmem:[#allocation3 + $0x28] sm:$0xff]
          %v1394 = vld [vmem:[#allocation3 + $0x30] sm:$0xff]
          %v1395 = vld [vmem:[#allocation3 + $0x38] sm:$0xff]
          %v1396 = vld [vmem:[#allocation3 + $0x40] sm:$0xff]
          %v1397 = vld [vmem:[#allocation3 + $0x48] sm:$0xff]
          %v1398 = vld [vmem:[#allocation3 + $0x50] sm:$0xff]
          %v1399 = vld [vmem:[#allocation3 + $0x58] sm:$0xff]
          %v1400 = vld [vmem:[#allocation3 + $0x60] sm:$0xff]
          %v1401 = vld [vmem:[#allocation3 + $0x68] sm:$0xff]
          %v1402 = vld [vmem:[#allocation3 + $0x70] sm:$0xff]
          %v1403 = vld [vmem:[#allocation3 + $0x78] sm:$0xff]
          %v1404 = vld [vmem:[#allocation3 + $0x80] sm:$0xff]
          %v1405 = vld [vmem:[#allocation3 + $0x88] sm:$0xff]
          %v1406 = vld [vmem:[#allocation3 + $0x90] sm:$0xff]
          %v1407 = vld [vmem:[#allocation3 + $0x98] sm:$0xff]
          %v1408 = vld [vmem:[#allocation3 + $0xa0] sm:$0xff]
          %v1409 = vld [vmem:[#allocation3 + $0xa8] sm:$0xff]
          %v1410 = vld [vmem:[#allocation3 + $0xb0] sm:$0xff]
          %v1411 = vld [vmem:[#allocation3 + $0xb8] sm:$0xff]
          %v1412 = vld [vmem:[#allocation3 + $0xc0] sm:$0xff]
          %v1413 = vld [vmem:[#allocation3 + $0xc8] sm:$0xff]
          %v1414 = vld [vmem:[#allocation3 + $0xd0] sm:$0xff]
          %v1415 = vld [vmem:[#allocation3 + $0xd8] sm:$0xff]
          %v1416 = vld [vmem:[#allocation3 + $0xe0] sm:$0xff]
          %v1417 = vld [vmem:[#allocation3 + $0xe8] sm:$0xff]
          %v1418 = vld [vmem:[#allocation3 + $0xf0] sm:$0xff]
          %v1419 = vld [vmem:[#allocation3 + $0xf8] sm:$0xff]
          %v1420 = vpack.c.bf16 %v1389, %v1388
          %v1421 = vpack.c.bf16 %v1391, %v1390
          %v1422 = vpack.c.bf16 %v1393, %v1392
          %v1423 = vpack.c.bf16 %v1395, %v1394
          %v1424 = vpack.c.bf16 %v1397, %v1396
          %v1425 = vpack.c.bf16 %v1399, %v1398
          %v1426 = vpack.c.bf16 %v1401, %v1400
          %v1427 = vpack.c.bf16 %v1403, %v1402
          %v1428 = vpack.c.bf16 %v1405, %v1404
          %v1429 = vpack.c.bf16 %v1407, %v1406
          %v1430 = vpack.c.bf16 %v1409, %v1408
          %v1431 = vpack.c.bf16 %v1411, %v1410
          %v1432 = vpack.c.bf16 %v1413, %v1412
          %v1433 = vpack.c.bf16 %v1415, %v1414
          %v1434 = vpack.c.bf16 %v1417, %v1416
          %v1435 = vpack.c.bf16 %v1419, %v1418
          %v1436 = vld [vmem:[%s4] sm:$0xf]
          %v1437 = vld [vmem:[%s8] sm:$0x1]
          %v1439 = vlaneseq
          %v1440 = vshrl.u32 %v1439, 7
          %v1441 = vsub.s32 0, %v1440
          %v1442 = vrot.slane %v1437, %v1441
          %v1445 = vsel %vm685, %v1420, 0
          %v1448 = vsel %vm685, %v1421, 0
          %v1451 = vsel %vm685, %v1422, 0
          %v1454 = vsel %vm685, %v1423, 0
          %v1457 = vsel %vm685, %v1424, 0
          %v1460 = vsel %vm685, %v1425, 0
          %v1463 = vsel %vm685, %v1426, 0
          %v1466 = vsel %vm685, %v1427, 0
          %v1469 = vsel %vm685, %v1428, 0
          %v1472 = vsel %vm685, %v1429, 0
          %v1475 = vsel %vm685, %v1430, 0
          %v1478 = vsel %vm685, %v1431, 0
          %v1481 = vsel %vm685, %v1432, 0
          %v1484 = vsel %vm685, %v1433, 0
          %v1487 = vsel %vm685, %v1434, 0
          %v1490 = vsel %vm685, %v1435, 0
          %v1493 = vsel %vm734, %v1436, 0
          %1495 = vmatprep.subr.bf16.mxu0 0
          %1496 = vmatpush1.bf16.msra.mxu0 %v1493
          %1497 = vmatprep.subr.bf16.mxu0 0
          %1498 = vmatpush1.bf16.msra.mxu0 0
          %1499 = vmatprep.subr.bf16.mxu0 0
          %1500 = vmatpush1.bf16.msra.mxu0 0
          %1501 = vmatprep.subr.bf16.mxu0 0
          %1502 = vmatpush1.bf16.msra.mxu0 0
          %1503 = vmatprep.subr.bf16.mxu0 0
          %1504 = vmatpush1.bf16.msra.mxu0 0
          %1505 = vmatprep.subr.bf16.mxu0 0
          %1506 = vmatpush1.bf16.msra.mxu0 0
          %1507 = vmatprep.subr.bf16.mxu0 0
          %1508 = vmatpush1.bf16.msra.mxu0 0
          %1509 = vmatprep.subr.bf16.mxu0 0
          %1510 = vmatpush1.bf16.msra.mxu0 0
          %1511 = vmatprep.subr.bf16.mxu0 0
          %1512 = vmatpush1.bf16.msra.mxu0 0
          %1513 = vmatprep.subr.bf16.mxu0 0
          %1514 = vmatpush1.bf16.msra.mxu0 0
          %1515 = vmatprep.subr.bf16.mxu0 0
          %1516 = vmatpush1.bf16.msra.mxu0 0
          %1517 = vmatprep.subr.bf16.mxu0 0
          %1518 = vmatpush1.bf16.msra.mxu0 0
          %1519 = vmatprep.subr.bf16.mxu0 0
          %1520 = vmatpush1.bf16.msra.mxu0 0
          %1521 = vmatprep.subr.bf16.mxu0 0
          %1522 = vmatpush1.bf16.msra.mxu0 0
          %1523 = vmatprep.subr.bf16.mxu0 0
          %1524 = vmatpush1.bf16.msra.mxu0 0
          %1525 = vmatprep.subr.bf16.mxu0 0
          %1526 = vmatpush1.bf16.msra.mxu0 0
          %1527 = vmatprep.mubr.bf16.mxu0 0
          %1528 = vmatmul.mubr.bf16.gmra.mrb[0].mxu0 %v1445
          %v1529 = vpop.f32.mrb[0].mxu0
          %v1530 = vadd.f32 %v1442, %v1529
          %v1531 = vpop.f32.mrb[0].mxu0
          %v1532 = vpop.f32.mrb[0].mxu0
          %v1533 = vadd.f32 %v1442, %v1532
          %v1534 = vpop.f32.mrb[0].mxu0
          %1535 = vmatprep.mubr.bf16.mxu0 0
          %1536 = vmatmul.mubr.bf16.gmra.mrb[0].mxu0 %v1448
          %v1537 = vpop.f32.mrb[0].mxu0
          %v1538 = vadd.f32 %v1442, %v1537
          %v1539 = vpop.f32.mrb[0].mxu0
          %v1540 = vpop.f32.mrb[0].mxu0
          %v1541 = vadd.f32 %v1442, %v1540
          %v1542 = vpop.f32.mrb[0].mxu0
          %1543 = vmatprep.mubr.bf16.mxu0 0
          %1544 = vmatmul.mubr.bf16.gmra.mrb[0].mxu0 %v1451
          %v1545 = vpop.f32.mrb[0].mxu0
          %v1546 = vadd.f32 %v1442, %v1545
          %v1547 = vpop.f32.mrb[0].mxu0
          %v1548 = vpop.f32.mrb[0].mxu0
          %v1549 = vadd.f32 %v1442, %v1548
          %v1550 = vpop.f32.mrb[0].mxu0
          %1551 = vmatprep.mubr.bf16.mxu0 0
          %1552 = vmatmul.mubr.bf16.gmra.mrb[0].mxu0 %v1454
          %v1553 = vpop.f32.mrb[0].mxu0
          %v1554 = vadd.f32 %v1442, %v1553
          %v1555 = vpop.f32.mrb[0].mxu0
          %v1556 = vpop.f32.mrb[0].mxu0
          %v1557 = vadd.f32 %v1442, %v1556
          %v1558 = vpop.f32.mrb[0].mxu0
          %1559 = vmatprep.mubr.bf16.mxu0 0
          %1560 = vmatmul.mubr.bf16.gmra.mrb[0].mxu0 %v1457
          %v1561 = vpop.f32.mrb[0].mxu0
          %v1562 = vadd.f32 %v1442, %v1561
          %v1563 = vpop.f32.mrb[0].mxu0
          %v1564 = vpop.f32.mrb[0].mxu0
          %v1565 = vadd.f32 %v1442, %v1564
          %v1566 = vpop.f32.mrb[0].mxu0
          %1567 = vmatprep.mubr.bf16.mxu0 0
          %1568 = vmatmul.mubr.bf16.gmra.mrb[0].mxu0 %v1460
          %v1569 = vpop.f32.mrb[0].mxu0
          %v1570 = vadd.f32 %v1442, %v1569
          %v1571 = vpop.f32.mrb[0].mxu0
          %v1572 = vpop.f32.mrb[0].mxu0
          %v1573 = vadd.f32 %v1442, %v1572
          %v1574 = vpop.f32.mrb[0].mxu0
          %1575 = vmatprep.mubr.bf16.mxu0 0
          %1576 = vmatmul.mubr.bf16.gmra.mrb[0].mxu0 %v1463
          %v1577 = vpop.f32.mrb[0].mxu0
          %v1578 = vadd.f32 %v1442, %v1577
          %v1579 = vpop.f32.mrb[0].mxu0
          %v1580 = vpop.f32.mrb[0].mxu0
          %v1581 = vadd.f32 %v1442, %v1580
          %v1582 = vpop.f32.mrb[0].mxu0
          %1583 = vmatprep.mubr.bf16.mxu0 0
          %1584 = vmatmul.mubr.bf16.gmra.mrb[0].mxu0 %v1466
          %v1585 = vpop.f32.mrb[0].mxu0
          %v1586 = vadd.f32 %v1442, %v1585
          %v1587 = vpop.f32.mrb[0].mxu0
          %v1588 = vpop.f32.mrb[0].mxu0
          %v1589 = vadd.f32 %v1442, %v1588
          %v1590 = vpop.f32.mrb[0].mxu0
          %1591 = vmatprep.mubr.bf16.mxu0 0
          %1592 = vmatmul.mubr.bf16.gmra.mrb[0].mxu0 %v1469
          %v1593 = vpop.f32.mrb[0].mxu0
          %v1594 = vadd.f32 %v1442, %v1593
          %v1595 = vpop.f32.mrb[0].mxu0
          %v1596 = vpop.f32.mrb[0].mxu0
          %v1597 = vadd.f32 %v1442, %v1596
          %v1598 = vpop.f32.mrb[0].mxu0
          %1599 = vmatprep.mubr.bf16.mxu0 0
          %1600 = vmatmul.mubr.bf16.gmra.mrb[0].mxu0 %v1472
          %v1601 = vpop.f32.mrb[0].mxu0
          %v1602 = vadd.f32 %v1442, %v1601
          %v1603 = vpop.f32.mrb[0].mxu0
          %v1604 = vpop.f32.mrb[0].mxu0
          %v1605 = vadd.f32 %v1442, %v1604
          %v1606 = vpop.f32.mrb[0].mxu0
          %1607 = vmatprep.mubr.bf16.mxu0 0
          %1608 = vmatmul.mubr.bf16.gmra.mrb[0].mxu0 %v1475
          %v1609 = vpop.f32.mrb[0].mxu0
          %v1610 = vadd.f32 %v1442, %v1609
          %v1611 = vpop.f32.mrb[0].mxu0
          %v1612 = vpop.f32.mrb[0].mxu0
          %v1613 = vadd.f32 %v1442, %v1612
          %v1614 = vpop.f32.mrb[0].mxu0
          %1615 = vmatprep.mubr.bf16.mxu0 0
          %1616 = vmatmul.mubr.bf16.gmra.mrb[0].mxu0 %v1478
          %v1617 = vpop.f32.mrb[0].mxu0
          %v1618 = vadd.f32 %v1442, %v1617
          %v1619 = vpop.f32.mrb[0].mxu0
          %v1620 = vpop.f32.mrb[0].mxu0
          %v1621 = vadd.f32 %v1442, %v1620
          %v1622 = vpop.f32.mrb[0].mxu0
          %1623 = vmatprep.mubr.bf16.mxu0 0
          %1624 = vmatmul.mubr.bf16.gmra.mrb[0].mxu0 %v1481
          %v1625 = vpop.f32.mrb[0].mxu0
          %v1626 = vadd.f32 %v1442, %v1625
          %v1627 = vpop.f32.mrb[0].mxu0
          %v1628 = vpop.f32.mrb[0].mxu0
          %v1629 = vadd.f32 %v1442, %v1628
          %v1630 = vpop.f32.mrb[0].mxu0
          %1631 = vmatprep.mubr.bf16.mxu0 0
          %1632 = vmatmul.mubr.bf16.gmra.mrb[0].mxu0 %v1484
          %v1633 = vpop.f32.mrb[0].mxu0
          %v1634 = vadd.f32 %v1442, %v1633
          %v1635 = vpop.f32.mrb[0].mxu0
          %v1636 = vpop.f32.mrb[0].mxu0
          %v1637 = vadd.f32 %v1442, %v1636
          %v1638 = vpop.f32.mrb[0].mxu0
          %1639 = vmatprep.mubr.bf16.mxu0 0
          %1640 = vmatmul.mubr.bf16.gmra.mrb[0].mxu0 %v1487
          %v1641 = vpop.f32.mrb[0].mxu0
          %v1642 = vadd.f32 %v1442, %v1641
          %v1643 = vpop.f32.mrb[0].mxu0
          %v1644 = vpop.f32.mrb[0].mxu0
          %v1645 = vadd.f32 %v1442, %v1644
          %v1646 = vpop.f32.mrb[0].mxu0
          %1647 = vmatprep.mubr.bf16.mxu0 0
          %1648 = vmatmul.mubr.bf16.gmra.mrb[0].mxu0 %v1490
          %v1649 = vpop.f32.mrb[0].mxu0
          %v1650 = vadd.f32 %v1442, %v1649
          %v1651 = vpop.f32.mrb[0].mxu0
          %v1652 = vpop.f32.mrb[0].mxu0
          %v1653 = vadd.f32 %v1442, %v1652
          %v1654 = vpop.f32.mrb[0].mxu0
          %1655 = vdwg.mxu0
          %v1656 = vmax.f32 %v1530, 0.0
          %v1657 = vmax.f32 %v1533, 0.0
          %v1658 = vmax.f32 %v1538, 0.0
          %v1659 = vmax.f32 %v1541, 0.0
          %v1660 = vmax.f32 %v1546, 0.0
          %v1661 = vmax.f32 %v1549, 0.0
          %v1662 = vmax.f32 %v1554, 0.0
          %v1663 = vmax.f32 %v1557, 0.0
          %v1664 = vmax.f32 %v1562, 0.0
          %v1665 = vmax.f32 %v1565, 0.0
          %v1666 = vmax.f32 %v1570, 0.0
          %v1667 = vmax.f32 %v1573, 0.0
          %v1668 = vmax.f32 %v1578, 0.0
          %v1669 = vmax.f32 %v1581, 0.0
          %v1670 = vmax.f32 %v1586, 0.0
          %v1671 = vmax.f32 %v1589, 0.0
          %v1672 = vmax.f32 %v1594, 0.0
          %v1673 = vmax.f32 %v1597, 0.0
          %v1674 = vmax.f32 %v1602, 0.0
          %v1675 = vmax.f32 %v1605, 0.0
          %v1676 = vmax.f32 %v1610, 0.0
          %v1677 = vmax.f32 %v1613, 0.0
          %v1678 = vmax.f32 %v1618, 0.0
          %v1679 = vmax.f32 %v1621, 0.0
          %v1680 = vmax.f32 %v1626, 0.0
          %v1681 = vmax.f32 %v1629, 0.0
          %v1682 = vmax.f32 %v1634, 0.0
          %v1683 = vmax.f32 %v1637, 0.0
          %v1684 = vmax.f32 %v1642, 0.0
          %v1685 = vmax.f32 %v1645, 0.0
          %v1686 = vmax.f32 %v1650, 0.0
          %v1687 = vmax.f32 %v1653, 0.0
          %1688 = vxpose.xlu0.b32.start [1/16] %v1656, 128
          %1689 = vxpose.xlu0.b32.cont [2/16] %v1657, 128
          %1690 = vxpose.xlu0.b32.cont [3/16] %v1658, 128
          %1691 = vxpose.xlu0.b32.cont [4/16] %v1659, 128
          %1692 = vxpose.xlu0.b32.cont [5/16] %v1660, 128
          %1693 = vxpose.xlu0.b32.cont [6/16] %v1661, 128
          %1694 = vxpose.xlu0.b32.cont [7/16] %v1662, 128
          %1695 = vxpose.xlu0.b32.cont [8/16] %v1663, 128
          %1696 = vxpose.xlu0.b32.cont [9/16] %v1664, 128
          %1697 = vxpose.xlu0.b32.cont [10/16] %v1665, 128
          %1698 = vxpose.xlu0.b32.cont [11/16] %v1666, 128
          %1699 = vxpose.xlu0.b32.cont [12/16] %v1667, 128
          %1700 = vxpose.xlu0.b32.cont [13/16] %v1668, 128
          %1701 = vxpose.xlu0.b32.cont [14/16] %v1669, 128
          %1702 = vxpose.xlu0.b32.cont [15/16] %v1670, 128
          %1703 = vxpose.xlu0.b32.end [16/16] %v1671, 128
          %v1704 = vpop.trf.xlu0
          %v1705 = vpop.trf.xlu0
          %v1706 = vpop.trf.xlu0
          %v1707 = vpop.trf.xlu0
          %v1708 = vpop.trf.xlu0
          %v1709 = vpop.trf.xlu0
          %v1710 = vpop.trf.xlu0
          %v1711 = vpop.trf.xlu0
          %v1712 = vpop.trf.xlu0
          %v1713 = vpop.trf.xlu0
          %v1714 = vpop.trf.xlu0
          %v1715 = vpop.trf.xlu0
          %v1716 = vpop.trf.xlu0
          %v1717 = vpop.trf.xlu0
          %v1718 = vpop.trf.xlu0
          %v1719 = vpop.trf.xlu0
          %1720 = vxpose.xlu0.b32.start [1/16] %v1672, 128
          %1721 = vxpose.xlu0.b32.cont [2/16] %v1673, 128
          %1722 = vxpose.xlu0.b32.cont [3/16] %v1674, 128
          %1723 = vxpose.xlu0.b32.cont [4/16] %v1675, 128
          %1724 = vxpose.xlu0.b32.cont [5/16] %v1676, 128
          %1725 = vxpose.xlu0.b32.cont [6/16] %v1677, 128
          %1726 = vxpose.xlu0.b32.cont [7/16] %v1678, 128
          %1727 = vxpose.xlu0.b32.cont [8/16] %v1679, 128
          %1728 = vxpose.xlu0.b32.cont [9/16] %v1680, 128
          %1729 = vxpose.xlu0.b32.cont [10/16] %v1681, 128
          %1730 = vxpose.xlu0.b32.cont [11/16] %v1682, 128
          %1731 = vxpose.xlu0.b32.cont [12/16] %v1683, 128
          %1732 = vxpose.xlu0.b32.cont [13/16] %v1684, 128
          %1733 = vxpose.xlu0.b32.cont [14/16] %v1685, 128
          %1734 = vxpose.xlu0.b32.cont [15/16] %v1686, 128
          %1735 = vxpose.xlu0.b32.end [16/16] %v1687, 128
          %v1736 = vpop.trf.xlu0
          %v1737 = vpop.trf.xlu0
          %v1738 = vpop.trf.xlu0
          %v1739 = vpop.trf.xlu0
          %v1740 = vpop.trf.xlu0
          %v1741 = vpop.trf.xlu0
          %v1742 = vpop.trf.xlu0
          %v1743 = vpop.trf.xlu0
          %v1744 = vpop.trf.xlu0
          %v1745 = vpop.trf.xlu0
          %v1746 = vpop.trf.xlu0
          %v1747 = vpop.trf.xlu0
          %v1748 = vpop.trf.xlu0
          %v1749 = vpop.trf.xlu0
          %v1750 = vpop.trf.xlu0
          %v1751 = vpop.trf.xlu0
          %v1752 = vld [vmem:[%s328] sm:$0xff]
          %v1753 = vld [vmem:[%s328 + $0x8] sm:$0xff]
          %v1754 = vld [vmem:[%s328 + $0x10] sm:$0xff]
          %v1755 = vld [vmem:[%s328 + $0x18] sm:$0xff]
          %v1756 = vadd.f32 %v1704, %v1752
          %v1757 = vadd.f32 %v1736, %v1753
          %v1758 = vadd.f32 %v1705, %v1754
          %v1759 = vadd.f32 %v1737, %v1755
          %1760 = vst [vmem:[%s362] sm:$0xff] %v1756
          %1761 = vst [vmem:[%s362 + $0x8] sm:$0xff] %v1757
          %1762 = vst [vmem:[%s362 + $0x10] sm:$0xff] %v1758
          %1763 = vst [vmem:[%s362 + $0x18] sm:$0xff] %v1759
        $region68: #{tpu_custom_call.1} parent=55 // pred_fallthru
          _
        %s1764 = sand.u32 %s240, 1
        %s1765 = scalar_lea.sflag [#allocation6], %s1764
        %s1766 = sand.u32 %s240, 1
        %s1767 = smul.addr %s1766, 32
        %s1768 = scalar_lea.vmem [#allocation7], %s1767
        // Predicated region
        $region69: #{tpu_custom_call.1} parent=55 // pred_check
          %p1769 = pneg %p250
        $region70: #{tpu_custom_call.1} parent=55 // pred_check_branch
          %1771 = sbr.rel (%p1769) target = $region72
        $region71: #{tpu_custom_call.1} parent=55 // pred_region
          %s1773 = ssub.s32 512, 512
          %1774 = vsyncadd %s1765, %s1773
          %s1775 = smul.addr %s30, 4
          %s1776 = smul.addr %s1775, 128
          %s1777 = scalar_lea.hbm %s9, %s1776
          %s1778 = sshll.u32 %s1768, 4
          %s1779 = int_to_ptr.vmem [resolvable:$true] %s1778
          %1784 = dma.vmem_to_hbm [thread:$0]  %s1779, 512, %s1777, %s1765, 256, 256, 16
        $region72: #{tpu_custom_call.1} parent=55 // pred_fallthru
          _
      $region56: #{tpu_custom_call.1} parent=5 // pred_fallthru
        _
      %p1785 = scmp.le.s32.totalorder 2, %s21
      // Predicated region
      $region73: #{tpu_custom_call.1} parent=5 // pred_check
        %p1786 = pneg %p1785
      $region74: #{tpu_custom_call.1} parent=5 // pred_check_branch
        %1788 = sbr.rel (%p1786) target = $region76
      $region75: #{tpu_custom_call.1} parent=5 // pred_region
        %s1789 = ssub.s32 %s21, 2
        // Predicated region
        $region77: #{tpu_custom_call.1} parent=75 // pred_check
          %p1790 = pneg %p256
        $region78: #{tpu_custom_call.1} parent=75 // pred_check_branch
          %1792 = sbr.rel (%p1790) target = $region80
        $region79: #{tpu_custom_call.1} parent=75 // pred_region
          %s1793 = sand.u32 %s241, 1
          %s1794 = scalar_lea.sflag [#allocation6], %s1793
          %s1795 = sand.u32 %s241, 1
          %s1796 = smul.addr %s1795, 32
          %s1797 = scalar_lea.vmem [#allocation7], %s1796
          %1798 = dma.done %s1794, 512
        $region80: #{tpu_custom_call.1} parent=75 // pred_fallthru
          _
      $region76: #{tpu_custom_call.1} parent=5 // pred_fallthru
        _
    $region6: #{tpu_custom_call.1} parent=1 // loop_footer
      %s25 = sadd.s32 1, %s21
    $region7: #{tpu_custom_call.1} parent=1 // loop_footer_branch
      %20 = sbr.rel target = $region3
    $region8: #{tpu_custom_call.1} parent=1 // loop_exit
      _
    %1799 = vsyncpa [#allocation5], 1
    %s1800 = scalar_lea.sflag [#allocation5], 1
    %1801 = vsyncpa %s1800, 1
    %1802 = vsyncpa [#allocation6], 1
    %s1803 = scalar_lea.sflag [#allocation6], 1
    %1804 = vsyncpa %s1803, 1

</llo_original>
